<compile_context>
chip_gen: v7x
topology: tpu7x:2x2x1
jax: 0.10.0
libtpu: 0.0.40
codegen_flags: <defaults>
</compile_context>

<pallas_src>
import functools

import jax
import jax.numpy as jnp
from jax import lax
from jax.experimental import pallas as pl
from jax.experimental.pallas import tpu as pltpu


def _attention_kernel(heads, dim_head, bt, n, approx_recip,
                      x_ref, wqkv_ref, wo_ref, bo_ref, o_ref, out_slab):
    """One grid step = `bt` batch elements = bt*n rows.

    x_ref   : (bt*n, dim)      activations (any float dtype; cast in-kernel)
    wqkv_ref: (dim, 3*inner)   compute dtype, softmax scale folded into q cols
    wo_ref  : (inner, dim_pad) compute dtype, lane-padded output projection
    bo_ref  : (1, dim_pad)     f32 bias (added to the f32 accumulator)
    o_ref   : (bt*n, dim_pad)  output tile (lane-dense store)
    out_slab: (bt*n, inner)    f32 VMEM scratch slab of per-head outputs
    """
    inner = heads * dim_head
    cdt = wqkv_ref.dtype                       # compute dtype chosen wrapper-side

    x = x_ref[...].astype(cdt)                                        # (rows, dim)
    # Fused QKV projection: one wide MXU matmul with f32 accumulation.
    qkv = jnp.dot(x, wqkv_ref[...],
                  preferred_element_type=jnp.float32)                 # (rows, 3*inner)

    # Static unroll over (batch-in-tile, head): bt/heads are small and static,
    # so all slice offsets are compile-time constants.  Each head's result is
    # stored straight into the VMEM slab (no list + concatenate), so the per-head
    # (n, n) scores / partials die before the next head starts.
    # NOTE: per-head slices are dim_head (<128) lanes wide; for production
    # dim_head=64 pair heads (or pad to 128) wrapper-side for lane-aligned slices.
    for bi in range(bt):
        rows = slice(bi * n, (bi + 1) * n)
        for h in range(heads):
            c0 = h * dim_head
            q = qkv[rows, c0:c0 + dim_head].astype(cdt)                # (n, dh)
            k = qkv[rows, inner + c0:inner + c0 + dim_head].astype(cdt)
            v = qkv[rows, 2 * inner + c0:2 * inner + c0 + dim_head].astype(cdt)

            # QK^T without materializing a transpose: contract last dims.
            s = lax.dot_general(q, k, (((1,), (1,)), ((), ())),
                                preferred_element_type=jnp.float32)    # (n, n) f32

            # Softmax in f32 (v5e-safe); normalize AFTER the PV matmul so the
            # rescale costs n*dh multiplies instead of n*n, via the EUP recip.
            s = s - jnp.max(s, axis=-1, keepdims=True)
            e = jnp.exp(s)
            denom = jnp.sum(e, axis=-1, keepdims=True)
            pv = jnp.dot(e.astype(cdt), v,
                         preferred_element_type=jnp.float32)           # (n, dh)
            out_slab[rows, c0:c0 + dim_head] = (
                pv * pl.reciprocal(denom, approx=approx_recip))

    # Deferred output projection: one dense matmul over the whole slab + bias.
    proj = jnp.dot(out_slab[...].astype(cdt), wo_ref[...],
                   preferred_element_type=jnp.float32)                 # (rows, dim_pad)
    o_ref[...] = (proj + bo_ref[...]).astype(o_ref.dtype)


def prepare_attention_params(w_qkv, w_out, b_out, *, heads, dim_head,
                             compute_dtype=jnp.float32):
    """One-time weight preprocessing — hoist OUT of the jit-hot path.

      * folds the softmax scale into the q-columns of W_qkv (BEFORE any dtype
        cast, so the scale is not double-quantized),
      * zero-pads the output projection to a 128-lane-dense width (unmasked
        output stores; the wrapper slices the padding back off),
      * pre-casts the matmul weights to `compute_dtype` (e.g. bf16) so the
        kernel DMAs half the weight bytes and does no in-kernel weight casts;
        the bias stays f32 (it is added to the f32 accumulator).
    """
    inner = heads * dim_head
    dim = w_out.shape[1]
    scale = dim_head ** -0.5
    w_qkv = w_qkv.at[:, :inner].multiply(scale)            # fold scale (pre-cast!)

    dim_pad = ((dim + 127) // 128) * 128                   # lane-dense output width
    if dim_pad != dim:
        w_out = jnp.pad(w_out, ((0, 0), (0, dim_pad - dim)))
        b_out = jnp.pad(b_out, (0, dim_pad - dim))

    return (w_qkv.astype(compute_dtype),
            w_out.astype(compute_dtype),
            b_out.reshape(1, -1).astype(jnp.float32))


def _vmem_budget_bytes():
    # ~Half the physical VMEM as the per-step budget (double-buffering +
    # compiler scratch headroom).  v5e/v6e: 128 MiB, v7x: 64 MiB.
    try:
        return pltpu.get_tpu_info().vmem_capacity_bytes // 2
    except Exception:
        return 32 << 20


def _pick_batch_tile(b, n, dim, dim_pad, inner, x_bytes, w_bytes):
    """Largest divisor of b giving up to ~256 rows/step (fills the MXU M dim)
    while the per-step working set stays inside the VMEM budget.

    v7x note: with very small b this yields grid=(1,); to keep both TensorCores
    busy there, pass a smaller batch_tile so the 'parallel' axis has >=2 steps.
    """
    budget = _vmem_budget_bytes()

    def footprint(bt):
        rows = bt * n
        io = 2 * rows * (dim + dim_pad) * x_bytes                  # x/out tiles (2-buf)
        wts = 2 * (dim * 3 * inner + inner * dim_pad + dim_pad) * w_bytes
        tmp = rows * 4 * (3 * inner + inner) + 2 * n * n * 4       # qkv + slab + scores
        return io + wts + tmp

    target = min(b, max(1, pl.cdiv(256, n)))
    candidates = [d for d in range(1, b + 1)
                  if b % d == 0 and d <= target and footprint(d) <= budget]
    return max(candidates) if candidates else 1


def attention_pallas(x, w_qkv, w_out, b_out2d, *, heads, dim_head,
                     batch_tile=None, approx_recip=True):
    """x: [b, n, dim] (any float dtype).  Params from prepare_attention_params():
    w_qkv: [dim, 3*inner] (scale folded, compute dtype), w_out: [inner, dim_pad],
    b_out2d: [1, dim_pad] f32.  Returns [b, n, dim] in x.dtype."""
    b, n, dim = x.shape
    inner = heads * dim_head
    dim_pad = w_out.shape[1]
    assert w_qkv.shape == (dim, 3 * inner) and b_out2d.shape == (1, dim_pad)
    assert n % 8 == 0, "sequence length must be a multiple of 8 (sublane tile)"

    if batch_tile is None:
        batch_tile = _pick_batch_tile(b, n, dim, dim_pad, inner,
                                      x.dtype.itemsize, w_qkv.dtype.itemsize)
    bt = batch_tile
    assert b % bt == 0, "batch_tile must divide the batch size"
    rows = bt * n

    kernel = functools.partial(_attention_kernel, heads, dim_head, bt, n,
                               approx_recip)

    out2 = pl.pallas_call(
        kernel,
        out_shape=jax.ShapeDtypeStruct((b * n, dim_pad), x.dtype),
        grid_spec=pltpu.PrefetchScalarGridSpec(
            num_scalar_prefetch=0,
            grid=(b // bt,),
            in_specs=[
                pl.BlockSpec((rows, dim), lambda i: (i, 0)),          # x row tile
                # Constant-index weight/bias tiles (resident across the grid).
                # NOTE: on v7x, pipeline_mode=pl.Buffered(1) on these three specs
                # frees the redundant second weight buffer (VMEM headroom).
                pl.BlockSpec((dim, 3 * inner), lambda i: (0, 0)),     # W_qkv
                pl.BlockSpec((inner, dim_pad), lambda i: (0, 0)),     # W_out (padded)
                pl.BlockSpec((1, dim_pad), lambda i: (0, 0)),         # b_out (padded)
            ],
            out_specs=pl.BlockSpec((rows, dim_pad), lambda i: (i, 0)),
            scratch_shapes=[pltpu.VMEM((rows, inner), jnp.float32)],  # head-output slab
        ),
        compiler_params=pltpu.CompilerParams(
            dimension_semantics=("parallel",)),
    )(x.reshape(b * n, dim), w_qkv, w_out, b_out2d)

    # Drop the lane padding and restore [b, n, dim] (layout plumbing only).
    return out2[:, :dim].reshape(b, n, dim)


def attention_reference(x, w_qkv, w_out, b_out, *, heads, dim_head):
    """Pure-JAX replica of the PyTorch forward (Dropout p=0 -> identity)."""
    b, n, dim = x.shape
    scale = dim_head ** -0.5
    qkv = x @ w_qkv                                          # [b, n, 3*h*dh]
    q, k, v = jnp.split(qkv, 3, axis=-1)

    def split_heads(t):
        return jnp.transpose(t.reshape(b, n, heads, dim_head), (0, 2, 1, 3))

    q, k, v = map(split_heads, (q, k, v))                    # [b, h, n, dh]
    dots = jnp.einsum("bhid,bhjd->bhij", q, k) * scale
    attn = jax.nn.softmax(dots, axis=-1)
    out = jnp.einsum("bhij,bhjd->bhid", attn, v)             # [b, h, n, dh]
    out = jnp.transpose(out, (0, 2, 1, 3)).reshape(b, n, heads * dim_head)
    return out @ w_out + b_out


if __name__ == "__main__":
    # Small shapes consistent with the module: dim=32, heads=4, dim_head=8.
    batch, seq, dim = 2, 8, 32
    heads, dim_head = 4, 8
    inner = heads * dim_head

    key = jax.random.PRNGKey(0)
    kx, kqkv, kwo, kbo = jax.random.split(key, 4)
    x = jax.random.normal(kx, (batch, seq, dim), dtype=jnp.float32)
    # to_qkv has no bias; to_out Linear has a bias (project_out=True here).
    w_qkv = jax.random.normal(kqkv, (dim, 3 * inner), dtype=jnp.float32) * 0.05
    w_out = jax.random.normal(kwo, (inner, dim), dtype=jnp.float32) * 0.05
    b_out = jax.random.normal(kbo, (dim,), dtype=jnp.float32) * 0.05

    ref = attention_reference(x, w_qkv, w_out, b_out,
                              heads=heads, dim_head=dim_head)

    # f32 MXU-operand path (approx EUP reciprocal in the softmax epilogue).
    pf32 = prepare_attention_params(w_qkv, w_out, b_out, heads=heads,
                                    dim_head=dim_head,
                                    compute_dtype=jnp.float32)
    out_f32 = jax.block_until_ready(
        attention_pallas(x, *pf32, heads=heads, dim_head=dim_head))
    assert out_f32.shape == (batch, seq, dim)
    assert jnp.allclose(out_f32, ref, atol=1e-2, rtol=1e-2), \
        float(jnp.max(jnp.abs(out_f32 - ref)))

    # bf16 MXU-operand path: weights pre-cast ONCE wrapper-side (half the DMA
    # bytes), f32 accumulation, f32 softmax / bias add; looser tolerance.
    pbf16 = prepare_attention_params(w_qkv, w_out, b_out, heads=heads,
                                     dim_head=dim_head,
                                     compute_dtype=jnp.bfloat16)
    out_bf16 = jax.block_until_ready(
        attention_pallas(x, *pbf16, heads=heads, dim_head=dim_head))
    assert out_bf16.shape == (batch, seq, dim)
    assert jnp.allclose(out_bf16, ref, atol=3e-2, rtol=3e-2), \
        float(jnp.max(jnp.abs(out_bf16 - ref)))

    print("KERNEL_OK")
</pallas_src>

<mosaic_0001>
module attributes {stable_mosaic.version = 11 : i64} {
  func.func @_attention_kernel(%arg0: i32, %arg1: memref<16x32xf32, #tpu.memory_space<vmem>>, %arg2: memref<32x96xf32, #tpu.memory_space<vmem>>, %arg3: memref<32x128xf32, #tpu.memory_space<vmem>>, %arg4: memref<1x128xf32, #tpu.memory_space<vmem>>, %arg5: memref<16x128xf32, #tpu.memory_space<vmem>>, %arg6: memref<16x32xf32, #tpu.memory_space<vmem>>) attributes {dimension_semantics = [#tpu.dimension_semantics<parallel>], iteration_bounds = array<i64: 1>, scalar_prefetch = 0 : i64, scratch_operands = 1 : i64, tpu.core_type = #tpu.core_type<tc>, window_params = [{transform_indices = @transform_0, window_bounds = array<i64: 16, 32>}, {pipeline_mode = #tpu.pipeline_mode<synchronous>, transform_indices = @transform_1, window_bounds = array<i64: 32, 96>}, {pipeline_mode = #tpu.pipeline_mode<synchronous>, transform_indices = @transform_2, window_bounds = array<i64: 32, 128>}, {pipeline_mode = #tpu.pipeline_mode<synchronous>, transform_indices = @transform_3, window_bounds = array<i64: 1, 128>}, {transform_indices = @transform_4, window_bounds = array<i64: 16, 128>}]} {
    %c0 = arith.constant 0 : index
    %c0_0 = arith.constant 0 : index
    %0 = vector.load %arg1[%c0, %c0_0] : memref<16x32xf32, #tpu.memory_space<vmem>>, vector<16x32xf32>
    %c0_1 = arith.constant 0 : index
    %c0_2 = arith.constant 0 : index
    %1 = vector.load %arg2[%c0_1, %c0_2] : memref<32x96xf32, #tpu.memory_space<vmem>>, vector<32x96xf32>
    %cst = arith.constant dense<0.000000e+00> : vector<16x96xf32>
    %2 = tpu.matmul %0, %1, %cst {dimension_numbers = #tpu.dot_dimension_numbers<[1], [0], [0], [1], [0, 0, 1, 1], [], []>} : vector<16x32xf32>, vector<32x96xf32>, vector<16x96xf32> -> vector<16x96xf32>
    %3 = vector.extract_strided_slice %2 {offsets = [0, 0], sizes = [8, 8], strides = [1, 1]} : vector<16x96xf32> to vector<8x8xf32>
    %4 = vector.extract_strided_slice %2 {offsets = [0, 32], sizes = [8, 8], strides = [1, 1]} : vector<16x96xf32> to vector<8x8xf32>
    %5 = vector.extract_strided_slice %2 {offsets = [0, 64], sizes = [8, 8], strides = [1, 1]} : vector<16x96xf32> to vector<8x8xf32>
    %cst_3 = arith.constant dense<0.000000e+00> : vector<8x8xf32>
    %6 = tpu.matmul %3, %4, %cst_3 {dimension_numbers = #tpu.dot_dimension_numbers<[1], [1], [0], [0], [0, 0, 1, 0], [], []>} : vector<8x8xf32>, vector<8x8xf32>, vector<8x8xf32> -> vector<8x8xf32>
    %cst_4 = arith.constant dense<0xFF800000> : vector<8xf32>
    %7 = vector.multi_reduction <maximumf>, %6, %cst_4 [1] : vector<8x8xf32> to vector<8xf32>
    %8 = vector.shape_cast %7 : vector<8xf32> to vector<8x1xf32>
    %9 = vector.broadcast %8 : vector<8x1xf32> to vector<8x8xf32>
    %10 = arith.subf %6, %9 : vector<8x8xf32>
    %11 = math.exp %10 : vector<8x8xf32>
    %cst_5 = arith.constant dense<0.000000e+00> : vector<8xf32>
    %12 = vector.multi_reduction <add>, %11, %cst_5 [1] : vector<8x8xf32> to vector<8xf32>
    %13 = vector.shape_cast %12 : vector<8xf32> to vector<8x1xf32>
    %cst_6 = arith.constant dense<0.000000e+00> : vector<8x8xf32>
    %14 = tpu.matmul %11, %5, %cst_6 {dimension_numbers = #tpu.dot_dimension_numbers<[1], [0], [0], [1], [0, 0, 1, 1], [], []>} : vector<8x8xf32>, vector<8x8xf32>, vector<8x8xf32> -> vector<8x8xf32>
    %15 = tpu.reciprocal %13 {approx = true} : vector<8x1xf32> -> vector<8x1xf32>
    %16 = vector.broadcast %15 : vector<8x1xf32> to vector<8x8xf32>
    %17 = arith.mulf %14, %16 : vector<8x8xf32>
    %c0_7 = arith.constant 0 : index
    %c0_8 = arith.constant 0 : index
    %18 = vector.load %arg6[%c0_7, %c0_8] : memref<16x32xf32, #tpu.memory_space<vmem>>, vector<8x8xf32>
    tpu.vector_store %arg6[%c0_7, %c0_8], %17 {strides = array<i32>} : memref<16x32xf32, #tpu.memory_space<vmem>>, vector<8x8xf32>,
    %19 = vector.extract_strided_slice %2 {offsets = [0, 8], sizes = [8, 8], strides = [1, 1]} : vector<16x96xf32> to vector<8x8xf32>
    %20 = vector.extract_strided_slice %2 {offsets = [0, 40], sizes = [8, 8], strides = [1, 1]} : vector<16x96xf32> to vector<8x8xf32>
    %21 = vector.extract_strided_slice %2 {offsets = [0, 72], sizes = [8, 8], strides = [1, 1]} : vector<16x96xf32> to vector<8x8xf32>
    %cst_9 = arith.constant dense<0.000000e+00> : vector<8x8xf32>
    %22 = tpu.matmul %19, %20, %cst_9 {dimension_numbers = #tpu.dot_dimension_numbers<[1], [1], [0], [0], [0, 0, 1, 0], [], []>} : vector<8x8xf32>, vector<8x8xf32>, vector<8x8xf32> -> vector<8x8xf32>
    %cst_10 = arith.constant dense<0xFF800000> : vector<8xf32>
    %23 = vector.multi_reduction <maximumf>, %22, %cst_10 [1] : vector<8x8xf32> to vector<8xf32>
    %24 = vector.shape_cast %23 : vector<8xf32> to vector<8x1xf32>
    %25 = vector.broadcast %24 : vector<8x1xf32> to vector<8x8xf32>
    %26 = arith.subf %22, %25 : vector<8x8xf32>
    %27 = math.exp %26 : vector<8x8xf32>
    %cst_11 = arith.constant dense<0.000000e+00> : vector<8xf32>
    %28 = vector.multi_reduction <add>, %27, %cst_11 [1] : vector<8x8xf32> to vector<8xf32>
    %29 = vector.shape_cast %28 : vector<8xf32> to vector<8x1xf32>
    %cst_12 = arith.constant dense<0.000000e+00> : vector<8x8xf32>
    %30 = tpu.matmul %27, %21, %cst_12 {dimension_numbers = #tpu.dot_dimension_numbers<[1], [0], [0], [1], [0, 0, 1, 1], [], []>} : vector<8x8xf32>, vector<8x8xf32>, vector<8x8xf32> -> vector<8x8xf32>
    %31 = tpu.reciprocal %29 {approx = true} : vector<8x1xf32> -> vector<8x1xf32>
    %32 = vector.broadcast %31 : vector<8x1xf32> to vector<8x8xf32>
    %33 = arith.mulf %30, %32 : vector<8x8xf32>
    %c0_13 = arith.constant 0 : index
    %c8 = arith.constant 8 : index
    %34 = vector.load %arg6[%c0_13, %c8] : memref<16x32xf32, #tpu.memory_space<vmem>>, vector<8x8xf32>
    tpu.vector_store %arg6[%c0_13, %c8], %33 {strides = array<i32>} : memref<16x32xf32, #tpu.memory_space<vmem>>, vector<8x8xf32>,
    %35 = vector.extract_strided_slice %2 {offsets = [0, 16], sizes = [8, 8], strides = [1, 1]} : vector<16x96xf32> to vector<8x8xf32>
    %36 = vector.extract_strided_slice %2 {offsets = [0, 48], sizes = [8, 8], strides = [1, 1]} : vector<16x96xf32> to vector<8x8xf32>
    %37 = vector.extract_strided_slice %2 {offsets = [0, 80], sizes = [8, 8], strides = [1, 1]} : vector<16x96xf32> to vector<8x8xf32>
    %cst_14 = arith.constant dense<0.000000e+00> : vector<8x8xf32>
    %38 = tpu.matmul %35, %36, %cst_14 {dimension_numbers = #tpu.dot_dimension_numbers<[1], [1], [0], [0], [0, 0, 1, 0], [], []>} : vector<8x8xf32>, vector<8x8xf32>, vector<8x8xf32> -> vector<8x8xf32>
    %cst_15 = arith.constant dense<0xFF800000> : vector<8xf32>
    %39 = vector.multi_reduction <maximumf>, %38, %cst_15 [1] : vector<8x8xf32> to vector<8xf32>
    %40 = vector.shape_cast %39 : vector<8xf32> to vector<8x1xf32>
    %41 = vector.broadcast %40 : vector<8x1xf32> to vector<8x8xf32>
    %42 = arith.subf %38, %41 : vector<8x8xf32>
    %43 = math.exp %42 : vector<8x8xf32>
    %cst_16 = arith.constant dense<0.000000e+00> : vector<8xf32>
    %44 = vector.multi_reduction <add>, %43, %cst_16 [1] : vector<8x8xf32> to vector<8xf32>
    %45 = vector.shape_cast %44 : vector<8xf32> to vector<8x1xf32>
    %cst_17 = arith.constant dense<0.000000e+00> : vector<8x8xf32>
    %46 = tpu.matmul %43, %37, %cst_17 {dimension_numbers = #tpu.dot_dimension_numbers<[1], [0], [0], [1], [0, 0, 1, 1], [], []>} : vector<8x8xf32>, vector<8x8xf32>, vector<8x8xf32> -> vector<8x8xf32>
    %47 = tpu.reciprocal %45 {approx = true} : vector<8x1xf32> -> vector<8x1xf32>
    %48 = vector.broadcast %47 : vector<8x1xf32> to vector<8x8xf32>
    %49 = arith.mulf %46, %48 : vector<8x8xf32>
    %c0_18 = arith.constant 0 : index
    %c16 = arith.constant 16 : index
    %50 = vector.load %arg6[%c0_18, %c16] : memref<16x32xf32, #tpu.memory_space<vmem>>, vector<8x8xf32>
    tpu.vector_store %arg6[%c0_18, %c16], %49 {strides = array<i32>} : memref<16x32xf32, #tpu.memory_space<vmem>>, vector<8x8xf32>,
    %51 = vector.extract_strided_slice %2 {offsets = [0, 24], sizes = [8, 8], strides = [1, 1]} : vector<16x96xf32> to vector<8x8xf32>
    %52 = vector.extract_strided_slice %2 {offsets = [0, 56], sizes = [8, 8], strides = [1, 1]} : vector<16x96xf32> to vector<8x8xf32>
    %53 = vector.extract_strided_slice %2 {offsets = [0, 88], sizes = [8, 8], strides = [1, 1]} : vector<16x96xf32> to vector<8x8xf32>
    %cst_19 = arith.constant dense<0.000000e+00> : vector<8x8xf32>
    %54 = tpu.matmul %51, %52, %cst_19 {dimension_numbers = #tpu.dot_dimension_numbers<[1], [1], [0], [0], [0, 0, 1, 0], [], []>} : vector<8x8xf32>, vector<8x8xf32>, vector<8x8xf32> -> vector<8x8xf32>
    %cst_20 = arith.constant dense<0xFF800000> : vector<8xf32>
    %55 = vector.multi_reduction <maximumf>, %54, %cst_20 [1] : vector<8x8xf32> to vector<8xf32>
    %56 = vector.shape_cast %55 : vector<8xf32> to vector<8x1xf32>
    %57 = vector.broadcast %56 : vector<8x1xf32> to vector<8x8xf32>
    %58 = arith.subf %54, %57 : vector<8x8xf32>
    %59 = math.exp %58 : vector<8x8xf32>
    %cst_21 = arith.constant dense<0.000000e+00> : vector<8xf32>
    %60 = vector.multi_reduction <add>, %59, %cst_21 [1] : vector<8x8xf32> to vector<8xf32>
    %61 = vector.shape_cast %60 : vector<8xf32> to vector<8x1xf32>
    %cst_22 = arith.constant dense<0.000000e+00> : vector<8x8xf32>
    %62 = tpu.matmul %59, %53, %cst_22 {dimension_numbers = #tpu.dot_dimension_numbers<[1], [0], [0], [1], [0, 0, 1, 1], [], []>} : vector<8x8xf32>, vector<8x8xf32>, vector<8x8xf32> -> vector<8x8xf32>
    %63 = tpu.reciprocal %61 {approx = true} : vector<8x1xf32> -> vector<8x1xf32>
    %64 = vector.broadcast %63 : vector<8x1xf32> to vector<8x8xf32>
    %65 = arith.mulf %62, %64 : vector<8x8xf32>
    %c0_23 = arith.constant 0 : index
    %c24 = arith.constant 24 : index
    %66 = vector.load %arg6[%c0_23, %c24] : memref<16x32xf32, #tpu.memory_space<vmem>>, vector<8x8xf32>
    tpu.vector_store %arg6[%c0_23, %c24], %65 {strides = array<i32>} : memref<16x32xf32, #tpu.memory_space<vmem>>, vector<8x8xf32>,
    %67 = vector.extract_strided_slice %2 {offsets = [8, 0], sizes = [8, 8], strides = [1, 1]} : vector<16x96xf32> to vector<8x8xf32>
    %68 = vector.extract_strided_slice %2 {offsets = [8, 32], sizes = [8, 8], strides = [1, 1]} : vector<16x96xf32> to vector<8x8xf32>
    %69 = vector.extract_strided_slice %2 {offsets = [8, 64], sizes = [8, 8], strides = [1, 1]} : vector<16x96xf32> to vector<8x8xf32>
    %cst_24 = arith.constant dense<0.000000e+00> : vector<8x8xf32>
    %70 = tpu.matmul %67, %68, %cst_24 {dimension_numbers = #tpu.dot_dimension_numbers<[1], [1], [0], [0], [0, 0, 1, 0], [], []>} : vector<8x8xf32>, vector<8x8xf32>, vector<8x8xf32> -> vector<8x8xf32>
    %cst_25 = arith.constant dense<0xFF800000> : vector<8xf32>
    %71 = vector.multi_reduction <maximumf>, %70, %cst_25 [1] : vector<8x8xf32> to vector<8xf32>
    %72 = vector.shape_cast %71 : vector<8xf32> to vector<8x1xf32>
    %73 = vector.broadcast %72 : vector<8x1xf32> to vector<8x8xf32>
    %74 = arith.subf %70, %73 : vector<8x8xf32>
    %75 = math.exp %74 : vector<8x8xf32>
    %cst_26 = arith.constant dense<0.000000e+00> : vector<8xf32>
    %76 = vector.multi_reduction <add>, %75, %cst_26 [1] : vector<8x8xf32> to vector<8xf32>
    %77 = vector.shape_cast %76 : vector<8xf32> to vector<8x1xf32>
    %cst_27 = arith.constant dense<0.000000e+00> : vector<8x8xf32>
    %78 = tpu.matmul %75, %69, %cst_27 {dimension_numbers = #tpu.dot_dimension_numbers<[1], [0], [0], [1], [0, 0, 1, 1], [], []>} : vector<8x8xf32>, vector<8x8xf32>, vector<8x8xf32> -> vector<8x8xf32>
    %79 = tpu.reciprocal %77 {approx = true} : vector<8x1xf32> -> vector<8x1xf32>
    %80 = vector.broadcast %79 : vector<8x1xf32> to vector<8x8xf32>
    %81 = arith.mulf %78, %80 : vector<8x8xf32>
    %c8_28 = arith.constant 8 : index
    %c0_29 = arith.constant 0 : index
    %82 = vector.load %arg6[%c8_28, %c0_29] : memref<16x32xf32, #tpu.memory_space<vmem>>, vector<8x8xf32>
    tpu.vector_store %arg6[%c8_28, %c0_29], %81 {strides = array<i32>} : memref<16x32xf32, #tpu.memory_space<vmem>>, vector<8x8xf32>,
    %83 = vector.extract_strided_slice %2 {offsets = [8, 8], sizes = [8, 8], strides = [1, 1]} : vector<16x96xf32> to vector<8x8xf32>
    %84 = vector.extract_strided_slice %2 {offsets = [8, 40], sizes = [8, 8], strides = [1, 1]} : vector<16x96xf32> to vector<8x8xf32>
    %85 = vector.extract_strided_slice %2 {offsets = [8, 72], sizes = [8, 8], strides = [1, 1]} : vector<16x96xf32> to vector<8x8xf32>
    %cst_30 = arith.constant dense<0.000000e+00> : vector<8x8xf32>
    %86 = tpu.matmul %83, %84, %cst_30 {dimension_numbers = #tpu.dot_dimension_numbers<[1], [1], [0], [0], [0, 0, 1, 0], [], []>} : vector<8x8xf32>, vector<8x8xf32>, vector<8x8xf32> -> vector<8x8xf32>
    %cst_31 = arith.constant dense<0xFF800000> : vector<8xf32>
    %87 = vector.multi_reduction <maximumf>, %86, %cst_31 [1] : vector<8x8xf32> to vector<8xf32>
    %88 = vector.shape_cast %87 : vector<8xf32> to vector<8x1xf32>
    %89 = vector.broadcast %88 : vector<8x1xf32> to vector<8x8xf32>
    %90 = arith.subf %86, %89 : vector<8x8xf32>
    %91 = math.exp %90 : vector<8x8xf32>
    %cst_32 = arith.constant dense<0.000000e+00> : vector<8xf32>
    %92 = vector.multi_reduction <add>, %91, %cst_32 [1] : vector<8x8xf32> to vector<8xf32>
    %93 = vector.shape_cast %92 : vector<8xf32> to vector<8x1xf32>
    %cst_33 = arith.constant dense<0.000000e+00> : vector<8x8xf32>
    %94 = tpu.matmul %91, %85, %cst_33 {dimension_numbers = #tpu.dot_dimension_numbers<[1], [0], [0], [1], [0, 0, 1, 1], [], []>} : vector<8x8xf32>, vector<8x8xf32>, vector<8x8xf32> -> vector<8x8xf32>
    %95 = tpu.reciprocal %93 {approx = true} : vector<8x1xf32> -> vector<8x1xf32>
    %96 = vector.broadcast %95 : vector<8x1xf32> to vector<8x8xf32>
    %97 = arith.mulf %94, %96 : vector<8x8xf32>
    %c8_34 = arith.constant 8 : index
    %c8_35 = arith.constant 8 : index
    %98 = vector.load %arg6[%c8_34, %c8_35] : memref<16x32xf32, #tpu.memory_space<vmem>>, vector<8x8xf32>
    tpu.vector_store %arg6[%c8_34, %c8_35], %97 {strides = array<i32>} : memref<16x32xf32, #tpu.memory_space<vmem>>, vector<8x8xf32>,
    %99 = vector.extract_strided_slice %2 {offsets = [8, 16], sizes = [8, 8], strides = [1, 1]} : vector<16x96xf32> to vector<8x8xf32>
    %100 = vector.extract_strided_slice %2 {offsets = [8, 48], sizes = [8, 8], strides = [1, 1]} : vector<16x96xf32> to vector<8x8xf32>
    %101 = vector.extract_strided_slice %2 {offsets = [8, 80], sizes = [8, 8], strides = [1, 1]} : vector<16x96xf32> to vector<8x8xf32>
    %cst_36 = arith.constant dense<0.000000e+00> : vector<8x8xf32>
    %102 = tpu.matmul %99, %100, %cst_36 {dimension_numbers = #tpu.dot_dimension_numbers<[1], [1], [0], [0], [0, 0, 1, 0], [], []>} : vector<8x8xf32>, vector<8x8xf32>, vector<8x8xf32> -> vector<8x8xf32>
    %cst_37 = arith.constant dense<0xFF800000> : vector<8xf32>
    %103 = vector.multi_reduction <maximumf>, %102, %cst_37 [1] : vector<8x8xf32> to vector<8xf32>
    %104 = vector.shape_cast %103 : vector<8xf32> to vector<8x1xf32>
    %105 = vector.broadcast %104 : vector<8x1xf32> to vector<8x8xf32>
    %106 = arith.subf %102, %105 : vector<8x8xf32>
    %107 = math.exp %106 : vector<8x8xf32>
    %cst_38 = arith.constant dense<0.000000e+00> : vector<8xf32>
    %108 = vector.multi_reduction <add>, %107, %cst_38 [1] : vector<8x8xf32> to vector<8xf32>
    %109 = vector.shape_cast %108 : vector<8xf32> to vector<8x1xf32>
    %cst_39 = arith.constant dense<0.000000e+00> : vector<8x8xf32>
    %110 = tpu.matmul %107, %101, %cst_39 {dimension_numbers = #tpu.dot_dimension_numbers<[1], [0], [0], [1], [0, 0, 1, 1], [], []>} : vector<8x8xf32>, vector<8x8xf32>, vector<8x8xf32> -> vector<8x8xf32>
    %111 = tpu.reciprocal %109 {approx = true} : vector<8x1xf32> -> vector<8x1xf32>
    %112 = vector.broadcast %111 : vector<8x1xf32> to vector<8x8xf32>
    %113 = arith.mulf %110, %112 : vector<8x8xf32>
    %c8_40 = arith.constant 8 : index
    %c16_41 = arith.constant 16 : index
    %114 = vector.load %arg6[%c8_40, %c16_41] : memref<16x32xf32, #tpu.memory_space<vmem>>, vector<8x8xf32>
    tpu.vector_store %arg6[%c8_40, %c16_41], %113 {strides = array<i32>} : memref<16x32xf32, #tpu.memory_space<vmem>>, vector<8x8xf32>,
    %115 = vector.extract_strided_slice %2 {offsets = [8, 24], sizes = [8, 8], strides = [1, 1]} : vector<16x96xf32> to vector<8x8xf32>
    %116 = vector.extract_strided_slice %2 {offsets = [8, 56], sizes = [8, 8], strides = [1, 1]} : vector<16x96xf32> to vector<8x8xf32>
    %117 = vector.extract_strided_slice %2 {offsets = [8, 88], sizes = [8, 8], strides = [1, 1]} : vector<16x96xf32> to vector<8x8xf32>
    %cst_42 = arith.constant dense<0.000000e+00> : vector<8x8xf32>
    %118 = tpu.matmul %115, %116, %cst_42 {dimension_numbers = #tpu.dot_dimension_numbers<[1], [1], [0], [0], [0, 0, 1, 0], [], []>} : vector<8x8xf32>, vector<8x8xf32>, vector<8x8xf32> -> vector<8x8xf32>
    %cst_43 = arith.constant dense<0xFF800000> : vector<8xf32>
    %119 = vector.multi_reduction <maximumf>, %118, %cst_43 [1] : vector<8x8xf32> to vector<8xf32>
    %120 = vector.shape_cast %119 : vector<8xf32> to vector<8x1xf32>
    %121 = vector.broadcast %120 : vector<8x1xf32> to vector<8x8xf32>
    %122 = arith.subf %118, %121 : vector<8x8xf32>
    %123 = math.exp %122 : vector<8x8xf32>
    %cst_44 = arith.constant dense<0.000000e+00> : vector<8xf32>
    %124 = vector.multi_reduction <add>, %123, %cst_44 [1] : vector<8x8xf32> to vector<8xf32>
    %125 = vector.shape_cast %124 : vector<8xf32> to vector<8x1xf32>
    %cst_45 = arith.constant dense<0.000000e+00> : vector<8x8xf32>
    %126 = tpu.matmul %123, %117, %cst_45 {dimension_numbers = #tpu.dot_dimension_numbers<[1], [0], [0], [1], [0, 0, 1, 1], [], []>} : vector<8x8xf32>, vector<8x8xf32>, vector<8x8xf32> -> vector<8x8xf32>
    %127 = tpu.reciprocal %125 {approx = true} : vector<8x1xf32> -> vector<8x1xf32>
    %128 = vector.broadcast %127 : vector<8x1xf32> to vector<8x8xf32>
    %129 = arith.mulf %126, %128 : vector<8x8xf32>
    %c8_46 = arith.constant 8 : index
    %c24_47 = arith.constant 24 : index
    %130 = vector.load %arg6[%c8_46, %c24_47] : memref<16x32xf32, #tpu.memory_space<vmem>>, vector<8x8xf32>
    tpu.vector_store %arg6[%c8_46, %c24_47], %129 {strides = array<i32>} : memref<16x32xf32, #tpu.memory_space<vmem>>, vector<8x8xf32>,
    %c0_48 = arith.constant 0 : index
    %c0_49 = arith.constant 0 : index
    %131 = vector.load %arg6[%c0_48, %c0_49] : memref<16x32xf32, #tpu.memory_space<vmem>>, vector<16x32xf32>
    %c0_50 = arith.constant 0 : index
    %c0_51 = arith.constant 0 : index
    %132 = vector.load %arg3[%c0_50, %c0_51] : memref<32x128xf32, #tpu.memory_space<vmem>>, vector<32x128xf32>
    %cst_52 = arith.constant dense<0.000000e+00> : vector<16x128xf32>
    %133 = tpu.matmul %131, %132, %cst_52 {dimension_numbers = #tpu.dot_dimension_numbers<[1], [0], [0], [1], [0, 0, 1, 1], [], []>} : vector<16x32xf32>, vector<32x128xf32>, vector<16x128xf32> -> vector<16x128xf32>
    %c0_53 = arith.constant 0 : index
    %c0_54 = arith.constant 0 : index
    %134 = vector.load %arg4[%c0_53, %c0_54] : memref<1x128xf32, #tpu.memory_space<vmem>>, vector<1x128xf32>
    %135 = vector.broadcast %134 : vector<1x128xf32> to vector<16x128xf32>
    %136 = arith.addf %133, %135 : vector<16x128xf32>
    %c0_55 = arith.constant 0 : index
    %c0_56 = arith.constant 0 : index
    %137 = vector.load %arg5[%c0_55, %c0_56] : memref<16x128xf32, #tpu.memory_space<vmem>>, vector<16x128xf32>
    tpu.vector_store %arg5[%c0_55, %c0_56], %136 {strides = array<i32>} : memref<16x128xf32, #tpu.memory_space<vmem>>, vector<16x128xf32>,
    return
  }
  func.func @transform_0(%arg0: i32) -> (i32, i32) {
    %c0_i32 = arith.constant 0 : i32
    %c0_i32_0 = arith.constant 0 : i32
    return %arg0, %c0_i32 : i32, i32
  }
  func.func @transform_1(%arg0: i32) -> (i32, i32) {
    %c0_i32 = arith.constant 0 : i32
    %c0_i32_0 = arith.constant 0 : i32
    %c0_i32_1 = arith.constant 0 : i32
    return %c0_i32, %c0_i32_0 : i32, i32
  }
  func.func @transform_2(%arg0: i32) -> (i32, i32) {
    %c0_i32 = arith.constant 0 : i32
    %c0_i32_0 = arith.constant 0 : i32
    %c0_i32_1 = arith.constant 0 : i32
    return %c0_i32, %c0_i32_0 : i32, i32
  }
  func.func @transform_3(%arg0: i32) -> (i32, i32) {
    %c0_i32 = arith.constant 0 : i32
    %c0_i32_0 = arith.constant 0 : i32
    %c0_i32_1 = arith.constant 0 : i32
    return %c0_i32, %c0_i32_0 : i32, i32
  }
  func.func @transform_4(%arg0: i32) -> (i32, i32) {
    %c0_i32 = arith.constant 0 : i32
    %c0_i32_0 = arith.constant 0 : i32
    return %arg0, %c0_i32 : i32, i32
  }
}

</mosaic_0001>

<llo_original>
// kernel: tpu_custom_call.1
$region0: #{tpu_custom_call.1}
  #allocation0 [shape = 'u32[]', space=smem, size = 0x4, offset = 0x4, fixed_abs, tag = 'smem constant byte address 0x4 - core index']
  #allocation1 [shape = 'u32[144,128]{1,0:T(1,128)}', space=vmem, size = 0x12000, scoped, tag = 'internal scratch']
  #allocation2 [shape = 'f32[16,32]{1,0:T(8,128)}', space=vmem, size = 0x2000, scoped, tag = 'scratch operand']
  %s0 = inlined_call_operand.hbm [shape: f32[16,32], index: 0, kind: input, shape index: {}]
  %s1 = inlined_call_operand.hbm [shape: f32[32,96], index: 1, kind: input, shape index: {}]
  %s2 = inlined_call_operand.hbm [shape: f32[32,128], index: 2, kind: input, shape index: {}]
  %s3 = inlined_call_operand.vmem [shape: f32[1,128], index: 3, kind: input, shape index: {}]
  %s4 = inlined_call_operand.hbm [shape: f32[16,128], index: 4, kind: output, shape index: {}]
  %s5 = sld [smem:[#allocation0]]
  $region38: #{tpu_custom_call.1} parent=0
    _
  %s7 = ssub.s32 1, %s5
  %s8 = scalar_select 0, %s7, %s5
  $region1: #{tpu_custom_call.1} parent=0
    #allocation3 [shape = 'u8[8192]{0}', space=vmem, size = 0x2000, scoped, tag = 'input window, operand 0, single buffered']
    #allocation4 [shape = 's32[1]{0}', space=sflag, size = 0x4, scoped, tag = 'scoped memory for tpu_custom_call.1']
    #allocation5 [shape = 's32[1]{0}', space=sflag, size = 0x4, scoped, tag = 'scoped memory for tpu_custom_call.1']
    #allocation6 [shape = 'u8[16384]{0}', space=vmem, size = 0x4000, scoped, tag = 'input window, operand 1, single buffered']
    #allocation7 [shape = 's32[1]{0}', space=sflag, size = 0x4, scoped, tag = 'scoped memory for tpu_custom_call.1']
    #allocation8 [shape = 'u8[16384]{0}', space=vmem, size = 0x4000, scoped, tag = 'input window, operand 2, single buffered']
    #allocation9 [shape = 'u8[8192]{0}', space=vmem, size = 0x2000, scoped, tag = 'output window, operand 0, single buffered']
    %9 = vsyncpa [#allocation4], 0
    %10 = vsyncpa [#allocation7], 0
    %11 = vsyncpa [#allocation5], 0
    // Predicated region
    $region2: #{tpu_custom_call.1} parent=1 // pred_check
      _
    $region3: #{tpu_custom_call.1} parent=1 // pred_check_branch
      %13 = sbr.rel (0) target = $region5
    $region4: #{tpu_custom_call.1} parent=1 // pred_region
      %s15 = ssub.s32 256, 256
      %16 = vsyncadd [#allocation4], %s15
      %s17 = sshll.u32 [#allocation3], 4
      %s18 = int_to_ptr.vmem [resolvable:$true] %s17
      %23 = dma.hbm_to_vmem [thread:$0]  %s0, 256, %s18, [#allocation4], 128, 128, 8
    $region5: #{tpu_custom_call.1} parent=1 // pred_fallthru
      _
    // Predicated region
    $region6: #{tpu_custom_call.1} parent=1 // pred_check
      _
    $region7: #{tpu_custom_call.1} parent=1 // pred_check_branch
      %25 = sbr.rel (0) target = $region9
    $region8: #{tpu_custom_call.1} parent=1 // pred_region
      %s27 = ssub.s32 512, 512
      %28 = vsyncadd [#allocation7], %s27
      %s29 = sshll.u32 [#allocation6], 4
      %s30 = int_to_ptr.vmem [resolvable:$true] %s29
      %35 = dma.hbm_to_vmem [thread:$0]  %s1, 512, %s30, [#allocation7], 128, 128, 8
    $region9: #{tpu_custom_call.1} parent=1 // pred_fallthru
      _
    // Predicated region
    $region10: #{tpu_custom_call.1} parent=1 // pred_check
      _
    $region11: #{tpu_custom_call.1} parent=1 // pred_check_branch
      %37 = sbr.rel (0) target = $region13
    $region12: #{tpu_custom_call.1} parent=1 // pred_region
      %s39 = ssub.s32 512, 512
      %40 = vsyncadd [#allocation7], %s39
      %s41 = sshll.u32 [#allocation8], 4
      %s42 = int_to_ptr.vmem [resolvable:$true] %s41
      %47 = dma.hbm_to_vmem [thread:$0]  %s2, 512, %s42, [#allocation7], 128, 128, 8
    $region13: #{tpu_custom_call.1} parent=1 // pred_fallthru
      _
    // Predicated region
    $region14: #{tpu_custom_call.1} parent=1 // pred_check
      _
    $region15: #{tpu_custom_call.1} parent=1 // pred_check_branch
      %49 = sbr.rel (0) target = $region17
    $region16: #{tpu_custom_call.1} parent=1 // pred_region
      _
    $region17: #{tpu_custom_call.1} parent=1 // pred_fallthru
      _
    // Predicated region
    $region18: #{tpu_custom_call.1} parent=1 // pred_check
      _
    $region19: #{tpu_custom_call.1} parent=1 // pred_check_branch
      %51 = sbr.rel (0) target = $region21
    $region20: #{tpu_custom_call.1} parent=1 // pred_region
      %52 = dma.done [#allocation4], 256
    $region21: #{tpu_custom_call.1} parent=1 // pred_fallthru
      _
    // Predicated region
    $region22: #{tpu_custom_call.1} parent=1 // pred_check
      _
    $region23: #{tpu_custom_call.1} parent=1 // pred_check_branch
      %54 = sbr.rel (0) target = $region25
    $region24: #{tpu_custom_call.1} parent=1 // pred_region
      %55 = dma.done [#allocation7], 512
    $region25: #{tpu_custom_call.1} parent=1 // pred_fallthru
      _
    // Predicated region
    $region26: #{tpu_custom_call.1} parent=1 // pred_check
      _
    $region27: #{tpu_custom_call.1} parent=1 // pred_check_branch
      %57 = sbr.rel (0) target = $region29
    $region28: #{tpu_custom_call.1} parent=1 // pred_region
      %58 = dma.done [#allocation7], 512
    $region29: #{tpu_custom_call.1} parent=1 // pred_fallthru
      _
    %v59 = vld [vmem:[#allocation3] sm:$0xff]
    %v60 = vld [vmem:[#allocation3 + $0x8] sm:$0xff]
    %v61 = vld [vmem:[#allocation6] sm:$0xff]
    %v62 = vld [vmem:[#allocation6 + $0x8] sm:$0xff]
    %v63 = vld [vmem:[#allocation6 + $0x10] sm:$0xff]
    %v64 = vld [vmem:[#allocation6 + $0x18] sm:$0xff]
    %vm65 = vcmask 261120
    %v67 = vsel %vm65, %v59, 0
    %v70 = vsel %vm65, %v60, 0
    %72 = vmatprep.subr.mxu0 0.0
    %73 = vmatpush1.msra.mxu0 %v61
    %74 = vmatprep.subr.mxu0 0.0
    %75 = vmatpush1.msra.mxu0 %v62
    %76 = vmatprep.subr.mxu0 0.0
    %77 = vmatpush1.msra.mxu0 %v63
    %78 = vmatprep.subr.mxu0 0.0
    %79 = vmatpush1.msra.mxu0 %v64
    %80 = vmatprep.subr.mxu0 0.0
    %81 = vmatpush1.msra.mxu0 0.0
    %82 = vmatprep.subr.mxu0 0.0
    %83 = vmatpush1.msra.mxu0 0.0
    %84 = vmatprep.subr.mxu0 0.0
    %85 = vmatpush1.msra.mxu0 0.0
    %86 = vmatprep.subr.mxu0 0.0
    %87 = vmatpush1.msra.mxu0 0.0
    %88 = vmatprep.subr.mxu0 0.0
    %89 = vmatpush1.msra.mxu0 0.0
    %90 = vmatprep.subr.mxu0 0.0
    %91 = vmatpush1.msra.mxu0 0.0
    %92 = vmatprep.subr.mxu0 0.0
    %93 = vmatpush1.msra.mxu0 0.0
    %94 = vmatprep.subr.mxu0 0.0
    %95 = vmatpush1.msra.mxu0 0.0
    %96 = vmatprep.subr.mxu0 0.0
    %97 = vmatpush1.msra.mxu0 0.0
    %98 = vmatprep.subr.mxu0 0.0
    %99 = vmatpush1.msra.mxu0 0.0
    %100 = vmatprep.subr.mxu0 0.0
    %101 = vmatpush1.msra.mxu0 0.0
    %102 = vmatprep.subr.mxu0 0.0
    %103 = vmatpush1.msra.mxu0 0.0
    %104 = vmatprep.subr.mxu0 0.0
    %105 = vmatpush1.msra.mxu0 0.0
    %106 = vmatprep.subr.mxu0 0.0
    %107 = vmatpush1.msra.mxu0 0.0
    %108 = vmatprep.subr.mxu0 0.0
    %109 = vmatpush1.msra.mxu0 0.0
    %110 = vmatprep.subr.mxu0 0.0
    %111 = vmatpush1.msra.mxu0 0.0
    %112 = vmatprep.subr.mxu0 0.0
    %113 = vmatpush1.msra.mxu0 0.0
    %114 = vmatprep.subr.mxu0 0.0
    %115 = vmatpush1.msra.mxu0 0.0
    %116 = vmatprep.subr.mxu0 0.0
    %117 = vmatpush1.msra.mxu0 0.0
    %118 = vmatprep.subr.mxu0 0.0
    %119 = vmatpush1.msra.mxu0 0.0
    %120 = vmatprep.subr.mxu0 0.0
    %121 = vmatpush1.msra.mxu0 0.0
    %122 = vmatprep.subr.mxu0 0.0
    %123 = vmatpush1.msra.mxu0 0.0
    %124 = vmatprep.subr.mxu0 0.0
    %125 = vmatpush1.msra.mxu0 0.0
    %126 = vmatprep.subr.mxu0 0.0
    %127 = vmatpush1.msra.mxu0 0.0
    %128 = vmatprep.subr.mxu0 0.0
    %129 = vmatpush1.msra.mxu0 0.0
    %130 = vmatprep.subr.mxu0 0.0
    %131 = vmatpush1.msra.mxu0 0.0
    %132 = vmatprep.subr.mxu0 0.0
    %133 = vmatpush1.msra.mxu0 0.0
    %134 = vmatprep.subr.mxu0 0.0
    %135 = vmatpush1.msra.mxu0 0.0
    %136 = vmatprep.mubr.f32.mxu0 0.0
    %137 = vmatmul.mubr.f32.gmra.mrb[0].mxu0 %v67
    %v138 = vpop.f32.mrb[0].mxu0
    %v139 = vadd.f32 0.0, %v138
    %v140 = vpop.f32.mrb[0].mxu0
    %141 = vmatprep.mubr.f32.mxu0 0.0
    %142 = vmatmul.mubr.f32.gmra.mrb[0].mxu0 %v70
    %v143 = vpop.f32.mrb[0].mxu0
    %v144 = vadd.f32 0.0, %v143
    %v145 = vpop.f32.mrb[0].mxu0
    %146 = vdwg.mxu0
    %148 = vrot.lane.b32.xlu0 %v139, 96
    %v149 = vpop.permute.xlu0 %148
    %vm150 = vcmask 64512
    %v151 = vsel %vm150, %v139, 0
    %v153 = vsel %vm150, %v149, 0
    %155 = vmatprep.subr.mxu0 0.0
    %156 = vmatpush1.xpose.msra.mxu0 %v153
    %157 = vmatprep.subr.mxu0 0.0
    %158 = vmatpush1.xpose.msra.mxu0 0.0
    %159 = vmatprep.subr.mxu0 0.0
    %160 = vmatpush1.xpose.msra.mxu0 0.0
    %161 = vmatprep.subr.mxu0 0.0
    %162 = vmatpush1.xpose.msra.mxu0 0.0
    %163 = vmatprep.subr.mxu0 0.0
    %164 = vmatpush1.xpose.msra.mxu0 0.0
    %165 = vmatprep.subr.mxu0 0.0
    %166 = vmatpush1.xpose.msra.mxu0 0.0
    %167 = vmatprep.subr.mxu0 0.0
    %168 = vmatpush1.xpose.msra.mxu0 0.0
    %169 = vmatprep.subr.mxu0 0.0
    %170 = vmatpush1.xpose.msra.mxu0 0.0
    %171 = vmatprep.subr.mxu0 0.0
    %172 = vmatpush1.xpose.msra.mxu0 0.0
    %173 = vmatprep.subr.mxu0 0.0
    %174 = vmatpush1.xpose.msra.mxu0 0.0
    %175 = vmatprep.subr.mxu0 0.0
    %176 = vmatpush1.xpose.msra.mxu0 0.0
    %177 = vmatprep.subr.mxu0 0.0
    %178 = vmatpush1.xpose.msra.mxu0 0.0
    %179 = vmatprep.subr.mxu0 0.0
    %180 = vmatpush1.xpose.msra.mxu0 0.0
    %181 = vmatprep.subr.mxu0 0.0
    %182 = vmatpush1.xpose.msra.mxu0 0.0
    %183 = vmatprep.subr.mxu0 0.0
    %184 = vmatpush1.xpose.msra.mxu0 0.0
    %185 = vmatprep.subr.mxu0 0.0
    %186 = vmatpush1.xpose.msra.mxu0 0.0
    %187 = vmatprep.subr.mxu0 0.0
    %188 = vmatpush1.xpose.msra.mxu0 0.0
    %189 = vmatprep.subr.mxu0 0.0
    %190 = vmatpush1.xpose.msra.mxu0 0.0
    %191 = vmatprep.subr.mxu0 0.0
    %192 = vmatpush1.xpose.msra.mxu0 0.0
    %193 = vmatprep.subr.mxu0 0.0
    %194 = vmatpush1.xpose.msra.mxu0 0.0
    %195 = vmatprep.subr.mxu0 0.0
    %196 = vmatpush1.xpose.msra.mxu0 0.0
    %197 = vmatprep.subr.mxu0 0.0
    %198 = vmatpush1.xpose.msra.mxu0 0.0
    %199 = vmatprep.subr.mxu0 0.0
    %200 = vmatpush1.xpose.msra.mxu0 0.0
    %201 = vmatprep.subr.mxu0 0.0
    %202 = vmatpush1.xpose.msra.mxu0 0.0
    %203 = vmatprep.subr.mxu0 0.0
    %204 = vmatpush1.xpose.msra.mxu0 0.0
    %205 = vmatprep.subr.mxu0 0.0
    %206 = vmatpush1.xpose.msra.mxu0 0.0
    %207 = vmatprep.subr.mxu0 0.0
    %208 = vmatpush1.xpose.msra.mxu0 0.0
    %209 = vmatprep.subr.mxu0 0.0
    %210 = vmatpush1.xpose.msra.mxu0 0.0
    %211 = vmatprep.subr.mxu0 0.0
    %212 = vmatpush1.xpose.msra.mxu0 0.0
    %213 = vmatprep.subr.mxu0 0.0
    %214 = vmatpush1.xpose.msra.mxu0 0.0
    %215 = vmatprep.subr.mxu0 0.0
    %216 = vmatpush1.xpose.msra.mxu0 0.0
    %217 = vmatprep.subr.mxu0 0.0
    %218 = vmatpush1.xpose.msra.mxu0 0.0
    %219 = vmatprep.mubr.f32.mxu0 0.0
    %220 = vmatmul.mubr.f32.gmra.mrb[0].mxu0 %v151
    %v221 = vpop.f32.mrb[0].mxu0
    %v222 = vadd.f32 0.0, %v221
    %v223 = vpop.f32.mrb[0].mxu0
    %224 = vdwg.mxu0
    %v225 = vsel %vm150, %v222, -inf
    %226 = vmax.xlane.f32.xlu0 %v225
    %v227 = vpop.xlane.xlu0 %226
    %v228 = vsub.f32 %v222, %v227
    %v229 = vmul.f32 %v228, 1.442695
    %v230 = vpow.pop %v229
    %v231 = vsel %vm150, %v230, 0.0
    %232 = vadd.xlane.f32.xlu0 %v231
    %v233 = vpop.xlane.xlu0 %232
    %234 = vrot.lane.b32.xlu0 %v139, 64
    %v235 = vpop.permute.xlu0 %234
    %v238 = vsel %vm150, %v230, 0
    %240 = vmatprep.subr.mxu0 0.0
    %241 = vmatpush1.msra.mxu0 %v235
    %242 = vmatprep.subr.mxu0 0.0
    %243 = vmatpush1.msra.mxu0 0.0
    %244 = vmatprep.subr.mxu0 0.0
    %245 = vmatpush1.msra.mxu0 0.0
    %246 = vmatprep.subr.mxu0 0.0
    %247 = vmatpush1.msra.mxu0 0.0
    %248 = vmatprep.subr.mxu0 0.0
    %249 = vmatpush1.msra.mxu0 0.0
    %250 = vmatprep.subr.mxu0 0.0
    %251 = vmatpush1.msra.mxu0 0.0
    %252 = vmatprep.subr.mxu0 0.0
    %253 = vmatpush1.msra.mxu0 0.0
    %254 = vmatprep.subr.mxu0 0.0
    %255 = vmatpush1.msra.mxu0 0.0
    %256 = vmatprep.subr.mxu0 0.0
    %257 = vmatpush1.msra.mxu0 0.0
    %258 = vmatprep.subr.mxu0 0.0
    %259 = vmatpush1.msra.mxu0 0.0
    %260 = vmatprep.subr.mxu0 0.0
    %261 = vmatpush1.msra.mxu0 0.0
    %262 = vmatprep.subr.mxu0 0.0
    %263 = vmatpush1.msra.mxu0 0.0
    %264 = vmatprep.subr.mxu0 0.0
    %265 = vmatpush1.msra.mxu0 0.0
    %266 = vmatprep.subr.mxu0 0.0
    %267 = vmatpush1.msra.mxu0 0.0
    %268 = vmatprep.subr.mxu0 0.0
    %269 = vmatpush1.msra.mxu0 0.0
    %270 = vmatprep.subr.mxu0 0.0
    %271 = vmatpush1.msra.mxu0 0.0
    %272 = vmatprep.subr.mxu0 0.0
    %273 = vmatpush1.msra.mxu0 0.0
    %274 = vmatprep.subr.mxu0 0.0
    %275 = vmatpush1.msra.mxu0 0.0
    %276 = vmatprep.subr.mxu0 0.0
    %277 = vmatpush1.msra.mxu0 0.0
    %278 = vmatprep.subr.mxu0 0.0
    %279 = vmatpush1.msra.mxu0 0.0
    %280 = vmatprep.subr.mxu0 0.0
    %281 = vmatpush1.msra.mxu0 0.0
    %282 = vmatprep.subr.mxu0 0.0
    %283 = vmatpush1.msra.mxu0 0.0
    %284 = vmatprep.subr.mxu0 0.0
    %285 = vmatpush1.msra.mxu0 0.0
    %286 = vmatprep.subr.mxu0 0.0
    %287 = vmatpush1.msra.mxu0 0.0
    %288 = vmatprep.subr.mxu0 0.0
    %289 = vmatpush1.msra.mxu0 0.0
    %290 = vmatprep.subr.mxu0 0.0
    %291 = vmatpush1.msra.mxu0 0.0
    %292 = vmatprep.subr.mxu0 0.0
    %293 = vmatpush1.msra.mxu0 0.0
    %294 = vmatprep.subr.mxu0 0.0
    %295 = vmatpush1.msra.mxu0 0.0
    %296 = vmatprep.subr.mxu0 0.0
    %297 = vmatpush1.msra.mxu0 0.0
    %298 = vmatprep.subr.mxu0 0.0
    %299 = vmatpush1.msra.mxu0 0.0
    %300 = vmatprep.subr.mxu0 0.0
    %301 = vmatpush1.msra.mxu0 0.0
    %302 = vmatprep.subr.mxu0 0.0
    %303 = vmatpush1.msra.mxu0 0.0
    %304 = vmatprep.mubr.f32.mxu0 0.0
    %305 = vmatmul.mubr.f32.gmra.mrb[0].mxu0 %v238
    %v306 = vpop.f32.mrb[0].mxu0
    %v307 = vadd.f32 0.0, %v306
    %v308 = vpop.f32.mrb[0].mxu0
    %309 = vdwg.mxu0
    %v310 = vrcp.pop %v233
    %v311 = vmul.f32 %v307, %v310
    %312 = vst.msk [vmem:[#allocation2] sm:$0xff] %vm150, %v311
    %313 = vrot.lane.b32.xlu0 %v139, 120
    %v314 = vpop.permute.xlu0 %313
    %315 = vrot.lane.b32.xlu0 %v139, 88
    %v316 = vpop.permute.xlu0 %315
    %v317 = vsel %vm150, %v314, 0
    %v319 = vsel %vm150, %v316, 0
    %321 = vmatprep.subr.mxu0 0.0
    %322 = vmatpush1.xpose.msra.mxu0 %v319
    %323 = vmatprep.subr.mxu0 0.0
    %324 = vmatpush1.xpose.msra.mxu0 0.0
    %325 = vmatprep.subr.mxu0 0.0
    %326 = vmatpush1.xpose.msra.mxu0 0.0
    %327 = vmatprep.subr.mxu0 0.0
    %328 = vmatpush1.xpose.msra.mxu0 0.0
    %329 = vmatprep.subr.mxu0 0.0
    %330 = vmatpush1.xpose.msra.mxu0 0.0
    %331 = vmatprep.subr.mxu0 0.0
    %332 = vmatpush1.xpose.msra.mxu0 0.0
    %333 = vmatprep.subr.mxu0 0.0
    %334 = vmatpush1.xpose.msra.mxu0 0.0
    %335 = vmatprep.subr.mxu0 0.0
    %336 = vmatpush1.xpose.msra.mxu0 0.0
    %337 = vmatprep.subr.mxu0 0.0
    %338 = vmatpush1.xpose.msra.mxu0 0.0
    %339 = vmatprep.subr.mxu0 0.0
    %340 = vmatpush1.xpose.msra.mxu0 0.0
    %341 = vmatprep.subr.mxu0 0.0
    %342 = vmatpush1.xpose.msra.mxu0 0.0
    %343 = vmatprep.subr.mxu0 0.0
    %344 = vmatpush1.xpose.msra.mxu0 0.0
    %345 = vmatprep.subr.mxu0 0.0
    %346 = vmatpush1.xpose.msra.mxu0 0.0
    %347 = vmatprep.subr.mxu0 0.0
    %348 = vmatpush1.xpose.msra.mxu0 0.0
    %349 = vmatprep.subr.mxu0 0.0
    %350 = vmatpush1.xpose.msra.mxu0 0.0
    %351 = vmatprep.subr.mxu0 0.0
    %352 = vmatpush1.xpose.msra.mxu0 0.0
    %353 = vmatprep.subr.mxu0 0.0
    %354 = vmatpush1.xpose.msra.mxu0 0.0
    %355 = vmatprep.subr.mxu0 0.0
    %356 = vmatpush1.xpose.msra.mxu0 0.0
    %357 = vmatprep.subr.mxu0 0.0
    %358 = vmatpush1.xpose.msra.mxu0 0.0
    %359 = vmatprep.subr.mxu0 0.0
    %360 = vmatpush1.xpose.msra.mxu0 0.0
    %361 = vmatprep.subr.mxu0 0.0
    %362 = vmatpush1.xpose.msra.mxu0 0.0
    %363 = vmatprep.subr.mxu0 0.0
    %364 = vmatpush1.xpose.msra.mxu0 0.0
    %365 = vmatprep.subr.mxu0 0.0
    %366 = vmatpush1.xpose.msra.mxu0 0.0
    %367 = vmatprep.subr.mxu0 0.0
    %368 = vmatpush1.xpose.msra.mxu0 0.0
    %369 = vmatprep.subr.mxu0 0.0
    %370 = vmatpush1.xpose.msra.mxu0 0.0
    %371 = vmatprep.subr.mxu0 0.0
    %372 = vmatpush1.xpose.msra.mxu0 0.0
    %373 = vmatprep.subr.mxu0 0.0
    %374 = vmatpush1.xpose.msra.mxu0 0.0
    %375 = vmatprep.subr.mxu0 0.0
    %376 = vmatpush1.xpose.msra.mxu0 0.0
    %377 = vmatprep.subr.mxu0 0.0
    %378 = vmatpush1.xpose.msra.mxu0 0.0
    %379 = vmatprep.subr.mxu0 0.0
    %380 = vmatpush1.xpose.msra.mxu0 0.0
    %381 = vmatprep.subr.mxu0 0.0
    %382 = vmatpush1.xpose.msra.mxu0 0.0
    %383 = vmatprep.subr.mxu0 0.0
    %384 = vmatpush1.xpose.msra.mxu0 0.0
    %385 = vmatprep.mubr.f32.mxu0 0.0
    %386 = vmatmul.mubr.f32.gmra.mrb[0].mxu0 %v317
    %v387 = vpop.f32.mrb[0].mxu0
    %v388 = vadd.f32 0.0, %v387
    %v389 = vpop.f32.mrb[0].mxu0
    %390 = vdwg.mxu0
    %v391 = vsel %vm150, %v388, -inf
    %392 = vmax.xlane.f32.xlu0 %v391
    %v393 = vpop.xlane.xlu0 %392
    %v394 = vsub.f32 %v388, %v393
    %v395 = vmul.f32 %v394, 1.442695
    %v396 = vpow.pop %v395
    %v397 = vsel %vm150, %v396, 0.0
    %398 = vadd.xlane.f32.xlu0 %v397
    %v399 = vpop.xlane.xlu0 %398
    %400 = vrot.lane.b32.xlu0 %v139, 56
    %v401 = vpop.permute.xlu0 %400
    %v404 = vsel %vm150, %v396, 0
    %406 = vmatprep.subr.mxu0 0.0
    %407 = vmatpush1.msra.mxu0 %v401
    %408 = vmatprep.subr.mxu0 0.0
    %409 = vmatpush1.msra.mxu0 0.0
    %410 = vmatprep.subr.mxu0 0.0
    %411 = vmatpush1.msra.mxu0 0.0
    %412 = vmatprep.subr.mxu0 0.0
    %413 = vmatpush1.msra.mxu0 0.0
    %414 = vmatprep.subr.mxu0 0.0
    %415 = vmatpush1.msra.mxu0 0.0
    %416 = vmatprep.subr.mxu0 0.0
    %417 = vmatpush1.msra.mxu0 0.0
    %418 = vmatprep.subr.mxu0 0.0
    %419 = vmatpush1.msra.mxu0 0.0
    %420 = vmatprep.subr.mxu0 0.0
    %421 = vmatpush1.msra.mxu0 0.0
    %422 = vmatprep.subr.mxu0 0.0
    %423 = vmatpush1.msra.mxu0 0.0
    %424 = vmatprep.subr.mxu0 0.0
    %425 = vmatpush1.msra.mxu0 0.0
    %426 = vmatprep.subr.mxu0 0.0
    %427 = vmatpush1.msra.mxu0 0.0
    %428 = vmatprep.subr.mxu0 0.0
    %429 = vmatpush1.msra.mxu0 0.0
    %430 = vmatprep.subr.mxu0 0.0
    %431 = vmatpush1.msra.mxu0 0.0
    %432 = vmatprep.subr.mxu0 0.0
    %433 = vmatpush1.msra.mxu0 0.0
    %434 = vmatprep.subr.mxu0 0.0
    %435 = vmatpush1.msra.mxu0 0.0
    %436 = vmatprep.subr.mxu0 0.0
    %437 = vmatpush1.msra.mxu0 0.0
    %438 = vmatprep.subr.mxu0 0.0
    %439 = vmatpush1.msra.mxu0 0.0
    %440 = vmatprep.subr.mxu0 0.0
    %441 = vmatpush1.msra.mxu0 0.0
    %442 = vmatprep.subr.mxu0 0.0
    %443 = vmatpush1.msra.mxu0 0.0
    %444 = vmatprep.subr.mxu0 0.0
    %445 = vmatpush1.msra.mxu0 0.0
    %446 = vmatprep.subr.mxu0 0.0
    %447 = vmatpush1.msra.mxu0 0.0
    %448 = vmatprep.subr.mxu0 0.0
    %449 = vmatpush1.msra.mxu0 0.0
    %450 = vmatprep.subr.mxu0 0.0
    %451 = vmatpush1.msra.mxu0 0.0
    %452 = vmatprep.subr.mxu0 0.0
    %453 = vmatpush1.msra.mxu0 0.0
    %454 = vmatprep.subr.mxu0 0.0
    %455 = vmatpush1.msra.mxu0 0.0
    %456 = vmatprep.subr.mxu0 0.0
    %457 = vmatpush1.msra.mxu0 0.0
    %458 = vmatprep.subr.mxu0 0.0
    %459 = vmatpush1.msra.mxu0 0.0
    %460 = vmatprep.subr.mxu0 0.0
    %461 = vmatpush1.msra.mxu0 0.0
    %462 = vmatprep.subr.mxu0 0.0
    %463 = vmatpush1.msra.mxu0 0.0
    %464 = vmatprep.subr.mxu0 0.0
    %465 = vmatpush1.msra.mxu0 0.0
    %466 = vmatprep.subr.mxu0 0.0
    %467 = vmatpush1.msra.mxu0 0.0
    %468 = vmatprep.subr.mxu0 0.0
    %469 = vmatpush1.msra.mxu0 0.0
    %470 = vmatprep.mubr.f32.mxu0 0.0
    %471 = vmatmul.mubr.f32.gmra.mrb[0].mxu0 %v404
    %v472 = vpop.f32.mrb[0].mxu0
    %v473 = vadd.f32 0.0, %v472
    %v474 = vpop.f32.mrb[0].mxu0
    %475 = vdwg.mxu0
    %v476 = vrcp.pop %v399
    %v477 = vmul.f32 %v473, %v476
    %479 = vrot.lane.b32.xlu0 %v477, 8
    %v480 = vpop.permute.xlu0 %479
    %vm482 = vcmask 130112
    %483 = vst.msk [vmem:[#allocation2] sm:$0xff] %vm482, %v480
    %484 = vrot.lane.b32.xlu0 %v139, 112
    %v485 = vpop.permute.xlu0 %484
    %486 = vrot.lane.b32.xlu0 %v139, 80
    %v487 = vpop.permute.xlu0 %486
    %v488 = vsel %vm150, %v485, 0
    %v490 = vsel %vm150, %v487, 0
    %492 = vmatprep.subr.mxu0 0.0
    %493 = vmatpush1.xpose.msra.mxu0 %v490
    %494 = vmatprep.subr.mxu0 0.0
    %495 = vmatpush1.xpose.msra.mxu0 0.0
    %496 = vmatprep.subr.mxu0 0.0
    %497 = vmatpush1.xpose.msra.mxu0 0.0
    %498 = vmatprep.subr.mxu0 0.0
    %499 = vmatpush1.xpose.msra.mxu0 0.0
    %500 = vmatprep.subr.mxu0 0.0
    %501 = vmatpush1.xpose.msra.mxu0 0.0
    %502 = vmatprep.subr.mxu0 0.0
    %503 = vmatpush1.xpose.msra.mxu0 0.0
    %504 = vmatprep.subr.mxu0 0.0
    %505 = vmatpush1.xpose.msra.mxu0 0.0
    %506 = vmatprep.subr.mxu0 0.0
    %507 = vmatpush1.xpose.msra.mxu0 0.0
    %508 = vmatprep.subr.mxu0 0.0
    %509 = vmatpush1.xpose.msra.mxu0 0.0
    %510 = vmatprep.subr.mxu0 0.0
    %511 = vmatpush1.xpose.msra.mxu0 0.0
    %512 = vmatprep.subr.mxu0 0.0
    %513 = vmatpush1.xpose.msra.mxu0 0.0
    %514 = vmatprep.subr.mxu0 0.0
    %515 = vmatpush1.xpose.msra.mxu0 0.0
    %516 = vmatprep.subr.mxu0 0.0
    %517 = vmatpush1.xpose.msra.mxu0 0.0
    %518 = vmatprep.subr.mxu0 0.0
    %519 = vmatpush1.xpose.msra.mxu0 0.0
    %520 = vmatprep.subr.mxu0 0.0
    %521 = vmatpush1.xpose.msra.mxu0 0.0
    %522 = vmatprep.subr.mxu0 0.0
    %523 = vmatpush1.xpose.msra.mxu0 0.0
    %524 = vmatprep.subr.mxu0 0.0
    %525 = vmatpush1.xpose.msra.mxu0 0.0
    %526 = vmatprep.subr.mxu0 0.0
    %527 = vmatpush1.xpose.msra.mxu0 0.0
    %528 = vmatprep.subr.mxu0 0.0
    %529 = vmatpush1.xpose.msra.mxu0 0.0
    %530 = vmatprep.subr.mxu0 0.0
    %531 = vmatpush1.xpose.msra.mxu0 0.0
    %532 = vmatprep.subr.mxu0 0.0
    %533 = vmatpush1.xpose.msra.mxu0 0.0
    %534 = vmatprep.subr.mxu0 0.0
    %535 = vmatpush1.xpose.msra.mxu0 0.0
    %536 = vmatprep.subr.mxu0 0.0
    %537 = vmatpush1.xpose.msra.mxu0 0.0
    %538 = vmatprep.subr.mxu0 0.0
    %539 = vmatpush1.xpose.msra.mxu0 0.0
    %540 = vmatprep.subr.mxu0 0.0
    %541 = vmatpush1.xpose.msra.mxu0 0.0
    %542 = vmatprep.subr.mxu0 0.0
    %543 = vmatpush1.xpose.msra.mxu0 0.0
    %544 = vmatprep.subr.mxu0 0.0
    %545 = vmatpush1.xpose.msra.mxu0 0.0
    %546 = vmatprep.subr.mxu0 0.0
    %547 = vmatpush1.xpose.msra.mxu0 0.0
    %548 = vmatprep.subr.mxu0 0.0
    %549 = vmatpush1.xpose.msra.mxu0 0.0
    %550 = vmatprep.subr.mxu0 0.0
    %551 = vmatpush1.xpose.msra.mxu0 0.0
    %552 = vmatprep.subr.mxu0 0.0
    %553 = vmatpush1.xpose.msra.mxu0 0.0
    %554 = vmatprep.subr.mxu0 0.0
    %555 = vmatpush1.xpose.msra.mxu0 0.0
    %556 = vmatprep.mubr.f32.mxu0 0.0
    %557 = vmatmul.mubr.f32.gmra.mrb[0].mxu0 %v488
    %v558 = vpop.f32.mrb[0].mxu0
    %v559 = vadd.f32 0.0, %v558
    %v560 = vpop.f32.mrb[0].mxu0
    %561 = vdwg.mxu0
    %v562 = vsel %vm150, %v559, -inf
    %563 = vmax.xlane.f32.xlu0 %v562
    %v564 = vpop.xlane.xlu0 %563
    %v565 = vsub.f32 %v559, %v564
    %v566 = vmul.f32 %v565, 1.442695
    %v567 = vpow.pop %v566
    %v568 = vsel %vm150, %v567, 0.0
    %569 = vadd.xlane.f32.xlu0 %v568
    %v570 = vpop.xlane.xlu0 %569
    %571 = vrot.lane.b32.xlu0 %v139, 48
    %v572 = vpop.permute.xlu0 %571
    %v575 = vsel %vm150, %v567, 0
    %577 = vmatprep.subr.mxu0 0.0
    %578 = vmatpush1.msra.mxu0 %v572
    %579 = vmatprep.subr.mxu0 0.0
    %580 = vmatpush1.msra.mxu0 0.0
    %581 = vmatprep.subr.mxu0 0.0
    %582 = vmatpush1.msra.mxu0 0.0
    %583 = vmatprep.subr.mxu0 0.0
    %584 = vmatpush1.msra.mxu0 0.0
    %585 = vmatprep.subr.mxu0 0.0
    %586 = vmatpush1.msra.mxu0 0.0
    %587 = vmatprep.subr.mxu0 0.0
    %588 = vmatpush1.msra.mxu0 0.0
    %589 = vmatprep.subr.mxu0 0.0
    %590 = vmatpush1.msra.mxu0 0.0
    %591 = vmatprep.subr.mxu0 0.0
    %592 = vmatpush1.msra.mxu0 0.0
    %593 = vmatprep.subr.mxu0 0.0
    %594 = vmatpush1.msra.mxu0 0.0
    %595 = vmatprep.subr.mxu0 0.0
    %596 = vmatpush1.msra.mxu0 0.0
    %597 = vmatprep.subr.mxu0 0.0
    %598 = vmatpush1.msra.mxu0 0.0
    %599 = vmatprep.subr.mxu0 0.0
    %600 = vmatpush1.msra.mxu0 0.0
    %601 = vmatprep.subr.mxu0 0.0
    %602 = vmatpush1.msra.mxu0 0.0
    %603 = vmatprep.subr.mxu0 0.0
    %604 = vmatpush1.msra.mxu0 0.0
    %605 = vmatprep.subr.mxu0 0.0
    %606 = vmatpush1.msra.mxu0 0.0
    %607 = vmatprep.subr.mxu0 0.0
    %608 = vmatpush1.msra.mxu0 0.0
    %609 = vmatprep.subr.mxu0 0.0
    %610 = vmatpush1.msra.mxu0 0.0
    %611 = vmatprep.subr.mxu0 0.0
    %612 = vmatpush1.msra.mxu0 0.0
    %613 = vmatprep.subr.mxu0 0.0
    %614 = vmatpush1.msra.mxu0 0.0
    %615 = vmatprep.subr.mxu0 0.0
    %616 = vmatpush1.msra.mxu0 0.0
    %617 = vmatprep.subr.mxu0 0.0
    %618 = vmatpush1.msra.mxu0 0.0
    %619 = vmatprep.subr.mxu0 0.0
    %620 = vmatpush1.msra.mxu0 0.0
    %621 = vmatprep.subr.mxu0 0.0
    %622 = vmatpush1.msra.mxu0 0.0
    %623 = vmatprep.subr.mxu0 0.0
    %624 = vmatpush1.msra.mxu0 0.0
    %625 = vmatprep.subr.mxu0 0.0
    %626 = vmatpush1.msra.mxu0 0.0
    %627 = vmatprep.subr.mxu0 0.0
    %628 = vmatpush1.msra.mxu0 0.0
    %629 = vmatprep.subr.mxu0 0.0
    %630 = vmatpush1.msra.mxu0 0.0
    %631 = vmatprep.subr.mxu0 0.0
    %632 = vmatpush1.msra.mxu0 0.0
    %633 = vmatprep.subr.mxu0 0.0
    %634 = vmatpush1.msra.mxu0 0.0
    %635 = vmatprep.subr.mxu0 0.0
    %636 = vmatpush1.msra.mxu0 0.0
    %637 = vmatprep.subr.mxu0 0.0
    %638 = vmatpush1.msra.mxu0 0.0
    %639 = vmatprep.subr.mxu0 0.0
    %640 = vmatpush1.msra.mxu0 0.0
    %641 = vmatprep.mubr.f32.mxu0 0.0
    %642 = vmatmul.mubr.f32.gmra.mrb[0].mxu0 %v575
    %v643 = vpop.f32.mrb[0].mxu0
    %v644 = vadd.f32 0.0, %v643
    %v645 = vpop.f32.mrb[0].mxu0
    %646 = vdwg.mxu0
    %v647 = vrcp.pop %v570
    %v648 = vmul.f32 %v644, %v647
    %650 = vrot.lane.b32.xlu0 %v648, 16
    %v651 = vpop.permute.xlu0 %650
    %vm653 = vcmask 195712
    %654 = vst.msk [vmem:[#allocation2] sm:$0xff] %vm653, %v651
    %655 = vrot.lane.b32.xlu0 %v139, 104
    %v656 = vpop.permute.xlu0 %655
    %657 = vrot.lane.b32.xlu0 %v139, 72
    %v658 = vpop.permute.xlu0 %657
    %v659 = vsel %vm150, %v656, 0
    %v661 = vsel %vm150, %v658, 0
    %663 = vmatprep.subr.mxu0 0.0
    %664 = vmatpush1.xpose.msra.mxu0 %v661
    %665 = vmatprep.subr.mxu0 0.0
    %666 = vmatpush1.xpose.msra.mxu0 0.0
    %667 = vmatprep.subr.mxu0 0.0
    %668 = vmatpush1.xpose.msra.mxu0 0.0
    %669 = vmatprep.subr.mxu0 0.0
    %670 = vmatpush1.xpose.msra.mxu0 0.0
    %671 = vmatprep.subr.mxu0 0.0
    %672 = vmatpush1.xpose.msra.mxu0 0.0
    %673 = vmatprep.subr.mxu0 0.0
    %674 = vmatpush1.xpose.msra.mxu0 0.0
    %675 = vmatprep.subr.mxu0 0.0
    %676 = vmatpush1.xpose.msra.mxu0 0.0
    %677 = vmatprep.subr.mxu0 0.0
    %678 = vmatpush1.xpose.msra.mxu0 0.0
    %679 = vmatprep.subr.mxu0 0.0
    %680 = vmatpush1.xpose.msra.mxu0 0.0
    %681 = vmatprep.subr.mxu0 0.0
    %682 = vmatpush1.xpose.msra.mxu0 0.0
    %683 = vmatprep.subr.mxu0 0.0
    %684 = vmatpush1.xpose.msra.mxu0 0.0
    %685 = vmatprep.subr.mxu0 0.0
    %686 = vmatpush1.xpose.msra.mxu0 0.0
    %687 = vmatprep.subr.mxu0 0.0
    %688 = vmatpush1.xpose.msra.mxu0 0.0
    %689 = vmatprep.subr.mxu0 0.0
    %690 = vmatpush1.xpose.msra.mxu0 0.0
    %691 = vmatprep.subr.mxu0 0.0
    %692 = vmatpush1.xpose.msra.mxu0 0.0
    %693 = vmatprep.subr.mxu0 0.0
    %694 = vmatpush1.xpose.msra.mxu0 0.0
    %695 = vmatprep.subr.mxu0 0.0
    %696 = vmatpush1.xpose.msra.mxu0 0.0
    %697 = vmatprep.subr.mxu0 0.0
    %698 = vmatpush1.xpose.msra.mxu0 0.0
    %699 = vmatprep.subr.mxu0 0.0
    %700 = vmatpush1.xpose.msra.mxu0 0.0
    %701 = vmatprep.subr.mxu0 0.0
    %702 = vmatpush1.xpose.msra.mxu0 0.0
    %703 = vmatprep.subr.mxu0 0.0
    %704 = vmatpush1.xpose.msra.mxu0 0.0
    %705 = vmatprep.subr.mxu0 0.0
    %706 = vmatpush1.xpose.msra.mxu0 0.0
    %707 = vmatprep.subr.mxu0 0.0
    %708 = vmatpush1.xpose.msra.mxu0 0.0
    %709 = vmatprep.subr.mxu0 0.0
    %710 = vmatpush1.xpose.msra.mxu0 0.0
    %711 = vmatprep.subr.mxu0 0.0
    %712 = vmatpush1.xpose.msra.mxu0 0.0
    %713 = vmatprep.subr.mxu0 0.0
    %714 = vmatpush1.xpose.msra.mxu0 0.0
    %715 = vmatprep.subr.mxu0 0.0
    %716 = vmatpush1.xpose.msra.mxu0 0.0
    %717 = vmatprep.subr.mxu0 0.0
    %718 = vmatpush1.xpose.msra.mxu0 0.0
    %719 = vmatprep.subr.mxu0 0.0
    %720 = vmatpush1.xpose.msra.mxu0 0.0
    %721 = vmatprep.subr.mxu0 0.0
    %722 = vmatpush1.xpose.msra.mxu0 0.0
    %723 = vmatprep.subr.mxu0 0.0
    %724 = vmatpush1.xpose.msra.mxu0 0.0
    %725 = vmatprep.subr.mxu0 0.0
    %726 = vmatpush1.xpose.msra.mxu0 0.0
    %727 = vmatprep.mubr.f32.mxu0 0.0
    %728 = vmatmul.mubr.f32.gmra.mrb[0].mxu0 %v659
    %v729 = vpop.f32.mrb[0].mxu0
    %v730 = vadd.f32 0.0, %v729
    %v731 = vpop.f32.mrb[0].mxu0
    %732 = vdwg.mxu0
    %v733 = vsel %vm150, %v730, -inf
    %734 = vmax.xlane.f32.xlu0 %v733
    %v735 = vpop.xlane.xlu0 %734
    %v736 = vsub.f32 %v730, %v735
    %v737 = vmul.f32 %v736, 1.442695
    %v738 = vpow.pop %v737
    %v739 = vsel %vm150, %v738, 0.0
    %740 = vadd.xlane.f32.xlu0 %v739
    %v741 = vpop.xlane.xlu0 %740
    %742 = vrot.lane.b32.xlu0 %v139, 40
    %v743 = vpop.permute.xlu0 %742
    %v746 = vsel %vm150, %v738, 0
    %748 = vmatprep.subr.mxu0 0.0
    %749 = vmatpush1.msra.mxu0 %v743
    %750 = vmatprep.subr.mxu0 0.0
    %751 = vmatpush1.msra.mxu0 0.0
    %752 = vmatprep.subr.mxu0 0.0
    %753 = vmatpush1.msra.mxu0 0.0
    %754 = vmatprep.subr.mxu0 0.0
    %755 = vmatpush1.msra.mxu0 0.0
    %756 = vmatprep.subr.mxu0 0.0
    %757 = vmatpush1.msra.mxu0 0.0
    %758 = vmatprep.subr.mxu0 0.0
    %759 = vmatpush1.msra.mxu0 0.0
    %760 = vmatprep.subr.mxu0 0.0
    %761 = vmatpush1.msra.mxu0 0.0
    %762 = vmatprep.subr.mxu0 0.0
    %763 = vmatpush1.msra.mxu0 0.0
    %764 = vmatprep.subr.mxu0 0.0
    %765 = vmatpush1.msra.mxu0 0.0
    %766 = vmatprep.subr.mxu0 0.0
    %767 = vmatpush1.msra.mxu0 0.0
    %768 = vmatprep.subr.mxu0 0.0
    %769 = vmatpush1.msra.mxu0 0.0
    %770 = vmatprep.subr.mxu0 0.0
    %771 = vmatpush1.msra.mxu0 0.0
    %772 = vmatprep.subr.mxu0 0.0
    %773 = vmatpush1.msra.mxu0 0.0
    %774 = vmatprep.subr.mxu0 0.0
    %775 = vmatpush1.msra.mxu0 0.0
    %776 = vmatprep.subr.mxu0 0.0
    %777 = vmatpush1.msra.mxu0 0.0
    %778 = vmatprep.subr.mxu0 0.0
    %779 = vmatpush1.msra.mxu0 0.0
    %780 = vmatprep.subr.mxu0 0.0
    %781 = vmatpush1.msra.mxu0 0.0
    %782 = vmatprep.subr.mxu0 0.0
    %783 = vmatpush1.msra.mxu0 0.0
    %784 = vmatprep.subr.mxu0 0.0
    %785 = vmatpush1.msra.mxu0 0.0
    %786 = vmatprep.subr.mxu0 0.0
    %787 = vmatpush1.msra.mxu0 0.0
    %788 = vmatprep.subr.mxu0 0.0
    %789 = vmatpush1.msra.mxu0 0.0
    %790 = vmatprep.subr.mxu0 0.0
    %791 = vmatpush1.msra.mxu0 0.0
    %792 = vmatprep.subr.mxu0 0.0
    %793 = vmatpush1.msra.mxu0 0.0
    %794 = vmatprep.subr.mxu0 0.0
    %795 = vmatpush1.msra.mxu0 0.0
    %796 = vmatprep.subr.mxu0 0.0
    %797 = vmatpush1.msra.mxu0 0.0
    %798 = vmatprep.subr.mxu0 0.0
    %799 = vmatpush1.msra.mxu0 0.0
    %800 = vmatprep.subr.mxu0 0.0
    %801 = vmatpush1.msra.mxu0 0.0
    %802 = vmatprep.subr.mxu0 0.0
    %803 = vmatpush1.msra.mxu0 0.0
    %804 = vmatprep.subr.mxu0 0.0
    %805 = vmatpush1.msra.mxu0 0.0
    %806 = vmatprep.subr.mxu0 0.0
    %807 = vmatpush1.msra.mxu0 0.0
    %808 = vmatprep.subr.mxu0 0.0
    %809 = vmatpush1.msra.mxu0 0.0
    %810 = vmatprep.subr.mxu0 0.0
    %811 = vmatpush1.msra.mxu0 0.0
    %812 = vmatprep.mubr.f32.mxu0 0.0
    %813 = vmatmul.mubr.f32.gmra.mrb[0].mxu0 %v746
    %v814 = vpop.f32.mrb[0].mxu0
    %v815 = vadd.f32 0.0, %v814
    %v816 = vpop.f32.mrb[0].mxu0
    %817 = vdwg.mxu0
    %v818 = vrcp.pop %v741
    %v819 = vmul.f32 %v815, %v818
    %821 = vrot.lane.b32.xlu0 %v819, 24
    %v822 = vpop.permute.xlu0 %821
    %vm824 = vcmask 261312
    %825 = vst.msk [vmem:[#allocation2] sm:$0xff] %vm824, %v822
    %827 = vrot.lane.b32.xlu0 %v144, 96
    %v828 = vpop.permute.xlu0 %827
    %v829 = vsel %vm150, %v144, 0
    %v831 = vsel %vm150, %v828, 0
    %833 = vmatprep.subr.mxu0 0.0
    %834 = vmatpush1.xpose.msra.mxu0 %v831
    %835 = vmatprep.subr.mxu0 0.0
    %836 = vmatpush1.xpose.msra.mxu0 0.0
    %837 = vmatprep.subr.mxu0 0.0
    %838 = vmatpush1.xpose.msra.mxu0 0.0
    %839 = vmatprep.subr.mxu0 0.0
    %840 = vmatpush1.xpose.msra.mxu0 0.0
    %841 = vmatprep.subr.mxu0 0.0
    %842 = vmatpush1.xpose.msra.mxu0 0.0
    %843 = vmatprep.subr.mxu0 0.0
    %844 = vmatpush1.xpose.msra.mxu0 0.0
    %845 = vmatprep.subr.mxu0 0.0
    %846 = vmatpush1.xpose.msra.mxu0 0.0
    %847 = vmatprep.subr.mxu0 0.0
    %848 = vmatpush1.xpose.msra.mxu0 0.0
    %849 = vmatprep.subr.mxu0 0.0
    %850 = vmatpush1.xpose.msra.mxu0 0.0
    %851 = vmatprep.subr.mxu0 0.0
    %852 = vmatpush1.xpose.msra.mxu0 0.0
    %853 = vmatprep.subr.mxu0 0.0
    %854 = vmatpush1.xpose.msra.mxu0 0.0
    %855 = vmatprep.subr.mxu0 0.0
    %856 = vmatpush1.xpose.msra.mxu0 0.0
    %857 = vmatprep.subr.mxu0 0.0
    %858 = vmatpush1.xpose.msra.mxu0 0.0
    %859 = vmatprep.subr.mxu0 0.0
    %860 = vmatpush1.xpose.msra.mxu0 0.0
    %861 = vmatprep.subr.mxu0 0.0
    %862 = vmatpush1.xpose.msra.mxu0 0.0
    %863 = vmatprep.subr.mxu0 0.0
    %864 = vmatpush1.xpose.msra.mxu0 0.0
    %865 = vmatprep.subr.mxu0 0.0
    %866 = vmatpush1.xpose.msra.mxu0 0.0
    %867 = vmatprep.subr.mxu0 0.0
    %868 = vmatpush1.xpose.msra.mxu0 0.0
    %869 = vmatprep.subr.mxu0 0.0
    %870 = vmatpush1.xpose.msra.mxu0 0.0
    %871 = vmatprep.subr.mxu0 0.0
    %872 = vmatpush1.xpose.msra.mxu0 0.0
    %873 = vmatprep.subr.mxu0 0.0
    %874 = vmatpush1.xpose.msra.mxu0 0.0
    %875 = vmatprep.subr.mxu0 0.0
    %876 = vmatpush1.xpose.msra.mxu0 0.0
    %877 = vmatprep.subr.mxu0 0.0
    %878 = vmatpush1.xpose.msra.mxu0 0.0
    %879 = vmatprep.subr.mxu0 0.0
    %880 = vmatpush1.xpose.msra.mxu0 0.0
    %881 = vmatprep.subr.mxu0 0.0
    %882 = vmatpush1.xpose.msra.mxu0 0.0
    %883 = vmatprep.subr.mxu0 0.0
    %884 = vmatpush1.xpose.msra.mxu0 0.0
    %885 = vmatprep.subr.mxu0 0.0
    %886 = vmatpush1.xpose.msra.mxu0 0.0
    %887 = vmatprep.subr.mxu0 0.0
    %888 = vmatpush1.xpose.msra.mxu0 0.0
    %889 = vmatprep.subr.mxu0 0.0
    %890 = vmatpush1.xpose.msra.mxu0 0.0
    %891 = vmatprep.subr.mxu0 0.0
    %892 = vmatpush1.xpose.msra.mxu0 0.0
    %893 = vmatprep.subr.mxu0 0.0
    %894 = vmatpush1.xpose.msra.mxu0 0.0
    %895 = vmatprep.subr.mxu0 0.0
    %896 = vmatpush1.xpose.msra.mxu0 0.0
    %897 = vmatprep.mubr.f32.mxu0 0.0
    %898 = vmatmul.mubr.f32.gmra.mrb[0].mxu0 %v829
    %v899 = vpop.f32.mrb[0].mxu0
    %v900 = vadd.f32 0.0, %v899
    %v901 = vpop.f32.mrb[0].mxu0
    %902 = vdwg.mxu0
    %v903 = vsel %vm150, %v900, -inf
    %904 = vmax.xlane.f32.xlu0 %v903
    %v905 = vpop.xlane.xlu0 %904
    %v906 = vsub.f32 %v900, %v905
    %v907 = vmul.f32 %v906, 1.442695
    %v908 = vpow.pop %v907
    %v909 = vsel %vm150, %v908, 0.0
    %910 = vadd.xlane.f32.xlu0 %v909
    %v911 = vpop.xlane.xlu0 %910
    %912 = vrot.lane.b32.xlu0 %v144, 64
    %v913 = vpop.permute.xlu0 %912
    %v916 = vsel %vm150, %v908, 0
    %918 = vmatprep.subr.mxu0 0.0
    %919 = vmatpush1.msra.mxu0 %v913
    %920 = vmatprep.subr.mxu0 0.0
    %921 = vmatpush1.msra.mxu0 0.0
    %922 = vmatprep.subr.mxu0 0.0
    %923 = vmatpush1.msra.mxu0 0.0
    %924 = vmatprep.subr.mxu0 0.0
    %925 = vmatpush1.msra.mxu0 0.0
    %926 = vmatprep.subr.mxu0 0.0
    %927 = vmatpush1.msra.mxu0 0.0
    %928 = vmatprep.subr.mxu0 0.0
    %929 = vmatpush1.msra.mxu0 0.0
    %930 = vmatprep.subr.mxu0 0.0
    %931 = vmatpush1.msra.mxu0 0.0
    %932 = vmatprep.subr.mxu0 0.0
    %933 = vmatpush1.msra.mxu0 0.0
    %934 = vmatprep.subr.mxu0 0.0
    %935 = vmatpush1.msra.mxu0 0.0
    %936 = vmatprep.subr.mxu0 0.0
    %937 = vmatpush1.msra.mxu0 0.0
    %938 = vmatprep.subr.mxu0 0.0
    %939 = vmatpush1.msra.mxu0 0.0
    %940 = vmatprep.subr.mxu0 0.0
    %941 = vmatpush1.msra.mxu0 0.0
    %942 = vmatprep.subr.mxu0 0.0
    %943 = vmatpush1.msra.mxu0 0.0
    %944 = vmatprep.subr.mxu0 0.0
    %945 = vmatpush1.msra.mxu0 0.0
    %946 = vmatprep.subr.mxu0 0.0
    %947 = vmatpush1.msra.mxu0 0.0
    %948 = vmatprep.subr.mxu0 0.0
    %949 = vmatpush1.msra.mxu0 0.0
    %950 = vmatprep.subr.mxu0 0.0
    %951 = vmatpush1.msra.mxu0 0.0
    %952 = vmatprep.subr.mxu0 0.0
    %953 = vmatpush1.msra.mxu0 0.0
    %954 = vmatprep.subr.mxu0 0.0
    %955 = vmatpush1.msra.mxu0 0.0
    %956 = vmatprep.subr.mxu0 0.0
    %957 = vmatpush1.msra.mxu0 0.0
    %958 = vmatprep.subr.mxu0 0.0
    %959 = vmatpush1.msra.mxu0 0.0
    %960 = vmatprep.subr.mxu0 0.0
    %961 = vmatpush1.msra.mxu0 0.0
    %962 = vmatprep.subr.mxu0 0.0
    %963 = vmatpush1.msra.mxu0 0.0
    %964 = vmatprep.subr.mxu0 0.0
    %965 = vmatpush1.msra.mxu0 0.0
    %966 = vmatprep.subr.mxu0 0.0
    %967 = vmatpush1.msra.mxu0 0.0
    %968 = vmatprep.subr.mxu0 0.0
    %969 = vmatpush1.msra.mxu0 0.0
    %970 = vmatprep.subr.mxu0 0.0
    %971 = vmatpush1.msra.mxu0 0.0
    %972 = vmatprep.subr.mxu0 0.0
    %973 = vmatpush1.msra.mxu0 0.0
    %974 = vmatprep.subr.mxu0 0.0
    %975 = vmatpush1.msra.mxu0 0.0
    %976 = vmatprep.subr.mxu0 0.0
    %977 = vmatpush1.msra.mxu0 0.0
    %978 = vmatprep.subr.mxu0 0.0
    %979 = vmatpush1.msra.mxu0 0.0
    %980 = vmatprep.subr.mxu0 0.0
    %981 = vmatpush1.msra.mxu0 0.0
    %982 = vmatprep.mubr.f32.mxu0 0.0
    %983 = vmatmul.mubr.f32.gmra.mrb[0].mxu0 %v916
    %v984 = vpop.f32.mrb[0].mxu0
    %v985 = vadd.f32 0.0, %v984
    %v986 = vpop.f32.mrb[0].mxu0
    %987 = vdwg.mxu0
    %v988 = vrcp.pop %v911
    %v989 = vmul.f32 %v985, %v988
    %990 = vst.msk [vmem:[#allocation2 + $0x8] sm:$0xff] %vm150, %v989
    %991 = vrot.lane.b32.xlu0 %v144, 120
    %v992 = vpop.permute.xlu0 %991
    %993 = vrot.lane.b32.xlu0 %v144, 88
    %v994 = vpop.permute.xlu0 %993
    %v995 = vsel %vm150, %v992, 0
    %v997 = vsel %vm150, %v994, 0
    %999 = vmatprep.subr.mxu0 0.0
    %1000 = vmatpush1.xpose.msra.mxu0 %v997
    %1001 = vmatprep.subr.mxu0 0.0
    %1002 = vmatpush1.xpose.msra.mxu0 0.0
    %1003 = vmatprep.subr.mxu0 0.0
    %1004 = vmatpush1.xpose.msra.mxu0 0.0
    %1005 = vmatprep.subr.mxu0 0.0
    %1006 = vmatpush1.xpose.msra.mxu0 0.0
    %1007 = vmatprep.subr.mxu0 0.0
    %1008 = vmatpush1.xpose.msra.mxu0 0.0
    %1009 = vmatprep.subr.mxu0 0.0
    %1010 = vmatpush1.xpose.msra.mxu0 0.0
    %1011 = vmatprep.subr.mxu0 0.0
    %1012 = vmatpush1.xpose.msra.mxu0 0.0
    %1013 = vmatprep.subr.mxu0 0.0
    %1014 = vmatpush1.xpose.msra.mxu0 0.0
    %1015 = vmatprep.subr.mxu0 0.0
    %1016 = vmatpush1.xpose.msra.mxu0 0.0
    %1017 = vmatprep.subr.mxu0 0.0
    %1018 = vmatpush1.xpose.msra.mxu0 0.0
    %1019 = vmatprep.subr.mxu0 0.0
    %1020 = vmatpush1.xpose.msra.mxu0 0.0
    %1021 = vmatprep.subr.mxu0 0.0
    %1022 = vmatpush1.xpose.msra.mxu0 0.0
    %1023 = vmatprep.subr.mxu0 0.0
    %1024 = vmatpush1.xpose.msra.mxu0 0.0
    %1025 = vmatprep.subr.mxu0 0.0
    %1026 = vmatpush1.xpose.msra.mxu0 0.0
    %1027 = vmatprep.subr.mxu0 0.0
    %1028 = vmatpush1.xpose.msra.mxu0 0.0
    %1029 = vmatprep.subr.mxu0 0.0
    %1030 = vmatpush1.xpose.msra.mxu0 0.0
    %1031 = vmatprep.subr.mxu0 0.0
    %1032 = vmatpush1.xpose.msra.mxu0 0.0
    %1033 = vmatprep.subr.mxu0 0.0
    %1034 = vmatpush1.xpose.msra.mxu0 0.0
    %1035 = vmatprep.subr.mxu0 0.0
    %1036 = vmatpush1.xpose.msra.mxu0 0.0
    %1037 = vmatprep.subr.mxu0 0.0
    %1038 = vmatpush1.xpose.msra.mxu0 0.0
    %1039 = vmatprep.subr.mxu0 0.0
    %1040 = vmatpush1.xpose.msra.mxu0 0.0
    %1041 = vmatprep.subr.mxu0 0.0
    %1042 = vmatpush1.xpose.msra.mxu0 0.0
    %1043 = vmatprep.subr.mxu0 0.0
    %1044 = vmatpush1.xpose.msra.mxu0 0.0
    %1045 = vmatprep.subr.mxu0 0.0
    %1046 = vmatpush1.xpose.msra.mxu0 0.0
    %1047 = vmatprep.subr.mxu0 0.0
    %1048 = vmatpush1.xpose.msra.mxu0 0.0
    %1049 = vmatprep.subr.mxu0 0.0
    %1050 = vmatpush1.xpose.msra.mxu0 0.0
    %1051 = vmatprep.subr.mxu0 0.0
    %1052 = vmatpush1.xpose.msra.mxu0 0.0
    %1053 = vmatprep.subr.mxu0 0.0
    %1054 = vmatpush1.xpose.msra.mxu0 0.0
    %1055 = vmatprep.subr.mxu0 0.0
    %1056 = vmatpush1.xpose.msra.mxu0 0.0
    %1057 = vmatprep.subr.mxu0 0.0
    %1058 = vmatpush1.xpose.msra.mxu0 0.0
    %1059 = vmatprep.subr.mxu0 0.0
    %1060 = vmatpush1.xpose.msra.mxu0 0.0
    %1061 = vmatprep.subr.mxu0 0.0
    %1062 = vmatpush1.xpose.msra.mxu0 0.0
    %1063 = vmatprep.mubr.f32.mxu0 0.0
    %1064 = vmatmul.mubr.f32.gmra.mrb[0].mxu0 %v995
    %v1065 = vpop.f32.mrb[0].mxu0
    %v1066 = vadd.f32 0.0, %v1065
    %v1067 = vpop.f32.mrb[0].mxu0
    %1068 = vdwg.mxu0
    %v1069 = vsel %vm150, %v1066, -inf
    %1070 = vmax.xlane.f32.xlu0 %v1069
    %v1071 = vpop.xlane.xlu0 %1070
    %v1072 = vsub.f32 %v1066, %v1071
    %v1073 = vmul.f32 %v1072, 1.442695
    %v1074 = vpow.pop %v1073
    %v1075 = vsel %vm150, %v1074, 0.0
    %1076 = vadd.xlane.f32.xlu0 %v1075
    %v1077 = vpop.xlane.xlu0 %1076
    %1078 = vrot.lane.b32.xlu0 %v144, 56
    %v1079 = vpop.permute.xlu0 %1078
    %v1082 = vsel %vm150, %v1074, 0
    %1084 = vmatprep.subr.mxu0 0.0
    %1085 = vmatpush1.msra.mxu0 %v1079
    %1086 = vmatprep.subr.mxu0 0.0
    %1087 = vmatpush1.msra.mxu0 0.0
    %1088 = vmatprep.subr.mxu0 0.0
    %1089 = vmatpush1.msra.mxu0 0.0
    %1090 = vmatprep.subr.mxu0 0.0
    %1091 = vmatpush1.msra.mxu0 0.0
    %1092 = vmatprep.subr.mxu0 0.0
    %1093 = vmatpush1.msra.mxu0 0.0
    %1094 = vmatprep.subr.mxu0 0.0
    %1095 = vmatpush1.msra.mxu0 0.0
    %1096 = vmatprep.subr.mxu0 0.0
    %1097 = vmatpush1.msra.mxu0 0.0
    %1098 = vmatprep.subr.mxu0 0.0
    %1099 = vmatpush1.msra.mxu0 0.0
    %1100 = vmatprep.subr.mxu0 0.0
    %1101 = vmatpush1.msra.mxu0 0.0
    %1102 = vmatprep.subr.mxu0 0.0
    %1103 = vmatpush1.msra.mxu0 0.0
    %1104 = vmatprep.subr.mxu0 0.0
    %1105 = vmatpush1.msra.mxu0 0.0
    %1106 = vmatprep.subr.mxu0 0.0
    %1107 = vmatpush1.msra.mxu0 0.0
    %1108 = vmatprep.subr.mxu0 0.0
    %1109 = vmatpush1.msra.mxu0 0.0
    %1110 = vmatprep.subr.mxu0 0.0
    %1111 = vmatpush1.msra.mxu0 0.0
    %1112 = vmatprep.subr.mxu0 0.0
    %1113 = vmatpush1.msra.mxu0 0.0
    %1114 = vmatprep.subr.mxu0 0.0
    %1115 = vmatpush1.msra.mxu0 0.0
    %1116 = vmatprep.subr.mxu0 0.0
    %1117 = vmatpush1.msra.mxu0 0.0
    %1118 = vmatprep.subr.mxu0 0.0
    %1119 = vmatpush1.msra.mxu0 0.0
    %1120 = vmatprep.subr.mxu0 0.0
    %1121 = vmatpush1.msra.mxu0 0.0
    %1122 = vmatprep.subr.mxu0 0.0
    %1123 = vmatpush1.msra.mxu0 0.0
    %1124 = vmatprep.subr.mxu0 0.0
    %1125 = vmatpush1.msra.mxu0 0.0
    %1126 = vmatprep.subr.mxu0 0.0
    %1127 = vmatpush1.msra.mxu0 0.0
    %1128 = vmatprep.subr.mxu0 0.0
    %1129 = vmatpush1.msra.mxu0 0.0
    %1130 = vmatprep.subr.mxu0 0.0
    %1131 = vmatpush1.msra.mxu0 0.0
    %1132 = vmatprep.subr.mxu0 0.0
    %1133 = vmatpush1.msra.mxu0 0.0
    %1134 = vmatprep.subr.mxu0 0.0
    %1135 = vmatpush1.msra.mxu0 0.0
    %1136 = vmatprep.subr.mxu0 0.0
    %1137 = vmatpush1.msra.mxu0 0.0
    %1138 = vmatprep.subr.mxu0 0.0
    %1139 = vmatpush1.msra.mxu0 0.0
    %1140 = vmatprep.subr.mxu0 0.0
    %1141 = vmatpush1.msra.mxu0 0.0
    %1142 = vmatprep.subr.mxu0 0.0
    %1143 = vmatpush1.msra.mxu0 0.0
    %1144 = vmatprep.subr.mxu0 0.0
    %1145 = vmatpush1.msra.mxu0 0.0
    %1146 = vmatprep.subr.mxu0 0.0
    %1147 = vmatpush1.msra.mxu0 0.0
    %1148 = vmatprep.mubr.f32.mxu0 0.0
    %1149 = vmatmul.mubr.f32.gmra.mrb[0].mxu0 %v1082
    %v1150 = vpop.f32.mrb[0].mxu0
    %v1151 = vadd.f32 0.0, %v1150
    %v1152 = vpop.f32.mrb[0].mxu0
    %1153 = vdwg.mxu0
    %v1154 = vrcp.pop %v1077
    %v1155 = vmul.f32 %v1151, %v1154
    %1157 = vrot.lane.b32.xlu0 %v1155, 8
    %v1158 = vpop.permute.xlu0 %1157
    %1160 = vst.msk [vmem:[#allocation2 + $0x8] sm:$0xff] %vm482, %v1158
    %1161 = vrot.lane.b32.xlu0 %v144, 112
    %v1162 = vpop.permute.xlu0 %1161
    %1163 = vrot.lane.b32.xlu0 %v144, 80
    %v1164 = vpop.permute.xlu0 %1163
    %v1165 = vsel %vm150, %v1162, 0
    %v1167 = vsel %vm150, %v1164, 0
    %1169 = vmatprep.subr.mxu0 0.0
    %1170 = vmatpush1.xpose.msra.mxu0 %v1167
    %1171 = vmatprep.subr.mxu0 0.0
    %1172 = vmatpush1.xpose.msra.mxu0 0.0
    %1173 = vmatprep.subr.mxu0 0.0
    %1174 = vmatpush1.xpose.msra.mxu0 0.0
    %1175 = vmatprep.subr.mxu0 0.0
    %1176 = vmatpush1.xpose.msra.mxu0 0.0
    %1177 = vmatprep.subr.mxu0 0.0
    %1178 = vmatpush1.xpose.msra.mxu0 0.0
    %1179 = vmatprep.subr.mxu0 0.0
    %1180 = vmatpush1.xpose.msra.mxu0 0.0
    %1181 = vmatprep.subr.mxu0 0.0
    %1182 = vmatpush1.xpose.msra.mxu0 0.0
    %1183 = vmatprep.subr.mxu0 0.0
    %1184 = vmatpush1.xpose.msra.mxu0 0.0
    %1185 = vmatprep.subr.mxu0 0.0
    %1186 = vmatpush1.xpose.msra.mxu0 0.0
    %1187 = vmatprep.subr.mxu0 0.0
    %1188 = vmatpush1.xpose.msra.mxu0 0.0
    %1189 = vmatprep.subr.mxu0 0.0
    %1190 = vmatpush1.xpose.msra.mxu0 0.0
    %1191 = vmatprep.subr.mxu0 0.0
    %1192 = vmatpush1.xpose.msra.mxu0 0.0
    %1193 = vmatprep.subr.mxu0 0.0
    %1194 = vmatpush1.xpose.msra.mxu0 0.0
    %1195 = vmatprep.subr.mxu0 0.0
    %1196 = vmatpush1.xpose.msra.mxu0 0.0
    %1197 = vmatprep.subr.mxu0 0.0
    %1198 = vmatpush1.xpose.msra.mxu0 0.0
    %1199 = vmatprep.subr.mxu0 0.0
    %1200 = vmatpush1.xpose.msra.mxu0 0.0
    %1201 = vmatprep.subr.mxu0 0.0
    %1202 = vmatpush1.xpose.msra.mxu0 0.0
    %1203 = vmatprep.subr.mxu0 0.0
    %1204 = vmatpush1.xpose.msra.mxu0 0.0
    %1205 = vmatprep.subr.mxu0 0.0
    %1206 = vmatpush1.xpose.msra.mxu0 0.0
    %1207 = vmatprep.subr.mxu0 0.0
    %1208 = vmatpush1.xpose.msra.mxu0 0.0
    %1209 = vmatprep.subr.mxu0 0.0
    %1210 = vmatpush1.xpose.msra.mxu0 0.0
    %1211 = vmatprep.subr.mxu0 0.0
    %1212 = vmatpush1.xpose.msra.mxu0 0.0
    %1213 = vmatprep.subr.mxu0 0.0
    %1214 = vmatpush1.xpose.msra.mxu0 0.0
    %1215 = vmatprep.subr.mxu0 0.0
    %1216 = vmatpush1.xpose.msra.mxu0 0.0
    %1217 = vmatprep.subr.mxu0 0.0
    %1218 = vmatpush1.xpose.msra.mxu0 0.0
    %1219 = vmatprep.subr.mxu0 0.0
    %1220 = vmatpush1.xpose.msra.mxu0 0.0
    %1221 = vmatprep.subr.mxu0 0.0
    %1222 = vmatpush1.xpose.msra.mxu0 0.0
    %1223 = vmatprep.subr.mxu0 0.0
    %1224 = vmatpush1.xpose.msra.mxu0 0.0
    %1225 = vmatprep.subr.mxu0 0.0
    %1226 = vmatpush1.xpose.msra.mxu0 0.0
    %1227 = vmatprep.subr.mxu0 0.0
    %1228 = vmatpush1.xpose.msra.mxu0 0.0
    %1229 = vmatprep.subr.mxu0 0.0
    %1230 = vmatpush1.xpose.msra.mxu0 0.0
    %1231 = vmatprep.subr.mxu0 0.0
    %1232 = vmatpush1.xpose.msra.mxu0 0.0
    %1233 = vmatprep.mubr.f32.mxu0 0.0
    %1234 = vmatmul.mubr.f32.gmra.mrb[0].mxu0 %v1165
    %v1235 = vpop.f32.mrb[0].mxu0
    %v1236 = vadd.f32 0.0, %v1235
    %v1237 = vpop.f32.mrb[0].mxu0
    %1238 = vdwg.mxu0
    %v1239 = vsel %vm150, %v1236, -inf
    %1240 = vmax.xlane.f32.xlu0 %v1239
    %v1241 = vpop.xlane.xlu0 %1240
    %v1242 = vsub.f32 %v1236, %v1241
    %v1243 = vmul.f32 %v1242, 1.442695
    %v1244 = vpow.pop %v1243
    %v1245 = vsel %vm150, %v1244, 0.0
    %1246 = vadd.xlane.f32.xlu0 %v1245
    %v1247 = vpop.xlane.xlu0 %1246
    %1248 = vrot.lane.b32.xlu0 %v144, 48
    %v1249 = vpop.permute.xlu0 %1248
    %v1252 = vsel %vm150, %v1244, 0
    %1254 = vmatprep.subr.mxu0 0.0
    %1255 = vmatpush1.msra.mxu0 %v1249
    %1256 = vmatprep.subr.mxu0 0.0
    %1257 = vmatpush1.msra.mxu0 0.0
    %1258 = vmatprep.subr.mxu0 0.0
    %1259 = vmatpush1.msra.mxu0 0.0
    %1260 = vmatprep.subr.mxu0 0.0
    %1261 = vmatpush1.msra.mxu0 0.0
    %1262 = vmatprep.subr.mxu0 0.0
    %1263 = vmatpush1.msra.mxu0 0.0
    %1264 = vmatprep.subr.mxu0 0.0
    %1265 = vmatpush1.msra.mxu0 0.0
    %1266 = vmatprep.subr.mxu0 0.0
    %1267 = vmatpush1.msra.mxu0 0.0
    %1268 = vmatprep.subr.mxu0 0.0
    %1269 = vmatpush1.msra.mxu0 0.0
    %1270 = vmatprep.subr.mxu0 0.0
    %1271 = vmatpush1.msra.mxu0 0.0
    %1272 = vmatprep.subr.mxu0 0.0
    %1273 = vmatpush1.msra.mxu0 0.0
    %1274 = vmatprep.subr.mxu0 0.0
    %1275 = vmatpush1.msra.mxu0 0.0
    %1276 = vmatprep.subr.mxu0 0.0
    %1277 = vmatpush1.msra.mxu0 0.0
    %1278 = vmatprep.subr.mxu0 0.0
    %1279 = vmatpush1.msra.mxu0 0.0
    %1280 = vmatprep.subr.mxu0 0.0
    %1281 = vmatpush1.msra.mxu0 0.0
    %1282 = vmatprep.subr.mxu0 0.0
    %1283 = vmatpush1.msra.mxu0 0.0
    %1284 = vmatprep.subr.mxu0 0.0
    %1285 = vmatpush1.msra.mxu0 0.0
    %1286 = vmatprep.subr.mxu0 0.0
    %1287 = vmatpush1.msra.mxu0 0.0
    %1288 = vmatprep.subr.mxu0 0.0
    %1289 = vmatpush1.msra.mxu0 0.0
    %1290 = vmatprep.subr.mxu0 0.0
    %1291 = vmatpush1.msra.mxu0 0.0
    %1292 = vmatprep.subr.mxu0 0.0
    %1293 = vmatpush1.msra.mxu0 0.0
    %1294 = vmatprep.subr.mxu0 0.0
    %1295 = vmatpush1.msra.mxu0 0.0
    %1296 = vmatprep.subr.mxu0 0.0
    %1297 = vmatpush1.msra.mxu0 0.0
    %1298 = vmatprep.subr.mxu0 0.0
    %1299 = vmatpush1.msra.mxu0 0.0
    %1300 = vmatprep.subr.mxu0 0.0
    %1301 = vmatpush1.msra.mxu0 0.0
    %1302 = vmatprep.subr.mxu0 0.0
    %1303 = vmatpush1.msra.mxu0 0.0
    %1304 = vmatprep.subr.mxu0 0.0
    %1305 = vmatpush1.msra.mxu0 0.0
    %1306 = vmatprep.subr.mxu0 0.0
    %1307 = vmatpush1.msra.mxu0 0.0
    %1308 = vmatprep.subr.mxu0 0.0
    %1309 = vmatpush1.msra.mxu0 0.0
    %1310 = vmatprep.subr.mxu0 0.0
    %1311 = vmatpush1.msra.mxu0 0.0
    %1312 = vmatprep.subr.mxu0 0.0
    %1313 = vmatpush1.msra.mxu0 0.0
    %1314 = vmatprep.subr.mxu0 0.0
    %1315 = vmatpush1.msra.mxu0 0.0
    %1316 = vmatprep.subr.mxu0 0.0
    %1317 = vmatpush1.msra.mxu0 0.0
    %1318 = vmatprep.mubr.f32.mxu0 0.0
    %1319 = vmatmul.mubr.f32.gmra.mrb[0].mxu0 %v1252
    %v1320 = vpop.f32.mrb[0].mxu0
    %v1321 = vadd.f32 0.0, %v1320
    %v1322 = vpop.f32.mrb[0].mxu0
    %1323 = vdwg.mxu0
    %v1324 = vrcp.pop %v1247
    %v1325 = vmul.f32 %v1321, %v1324
    %1327 = vrot.lane.b32.xlu0 %v1325, 16
    %v1328 = vpop.permute.xlu0 %1327
    %1330 = vst.msk [vmem:[#allocation2 + $0x8] sm:$0xff] %vm653, %v1328
    %1331 = vrot.lane.b32.xlu0 %v144, 104
    %v1332 = vpop.permute.xlu0 %1331
    %1333 = vrot.lane.b32.xlu0 %v144, 72
    %v1334 = vpop.permute.xlu0 %1333
    %v1335 = vsel %vm150, %v1332, 0
    %v1337 = vsel %vm150, %v1334, 0
    %1339 = vmatprep.subr.mxu0 0.0
    %1340 = vmatpush1.xpose.msra.mxu0 %v1337
    %1341 = vmatprep.subr.mxu0 0.0
    %1342 = vmatpush1.xpose.msra.mxu0 0.0
    %1343 = vmatprep.subr.mxu0 0.0
    %1344 = vmatpush1.xpose.msra.mxu0 0.0
    %1345 = vmatprep.subr.mxu0 0.0
    %1346 = vmatpush1.xpose.msra.mxu0 0.0
    %1347 = vmatprep.subr.mxu0 0.0
    %1348 = vmatpush1.xpose.msra.mxu0 0.0
    %1349 = vmatprep.subr.mxu0 0.0
    %1350 = vmatpush1.xpose.msra.mxu0 0.0
    %1351 = vmatprep.subr.mxu0 0.0
    %1352 = vmatpush1.xpose.msra.mxu0 0.0
    %1353 = vmatprep.subr.mxu0 0.0
    %1354 = vmatpush1.xpose.msra.mxu0 0.0
    %1355 = vmatprep.subr.mxu0 0.0
    %1356 = vmatpush1.xpose.msra.mxu0 0.0
    %1357 = vmatprep.subr.mxu0 0.0
    %1358 = vmatpush1.xpose.msra.mxu0 0.0
    %1359 = vmatprep.subr.mxu0 0.0
    %1360 = vmatpush1.xpose.msra.mxu0 0.0
    %1361 = vmatprep.subr.mxu0 0.0
    %1362 = vmatpush1.xpose.msra.mxu0 0.0
    %1363 = vmatprep.subr.mxu0 0.0
    %1364 = vmatpush1.xpose.msra.mxu0 0.0
    %1365 = vmatprep.subr.mxu0 0.0
    %1366 = vmatpush1.xpose.msra.mxu0 0.0
    %1367 = vmatprep.subr.mxu0 0.0
    %1368 = vmatpush1.xpose.msra.mxu0 0.0
    %1369 = vmatprep.subr.mxu0 0.0
    %1370 = vmatpush1.xpose.msra.mxu0 0.0
    %1371 = vmatprep.subr.mxu0 0.0
    %1372 = vmatpush1.xpose.msra.mxu0 0.0
    %1373 = vmatprep.subr.mxu0 0.0
    %1374 = vmatpush1.xpose.msra.mxu0 0.0
    %1375 = vmatprep.subr.mxu0 0.0
    %1376 = vmatpush1.xpose.msra.mxu0 0.0
    %1377 = vmatprep.subr.mxu0 0.0
    %1378 = vmatpush1.xpose.msra.mxu0 0.0
    %1379 = vmatprep.subr.mxu0 0.0
    %1380 = vmatpush1.xpose.msra.mxu0 0.0
    %1381 = vmatprep.subr.mxu0 0.0
    %1382 = vmatpush1.xpose.msra.mxu0 0.0
    %1383 = vmatprep.subr.mxu0 0.0
    %1384 = vmatpush1.xpose.msra.mxu0 0.0
    %1385 = vmatprep.subr.mxu0 0.0
    %1386 = vmatpush1.xpose.msra.mxu0 0.0
    %1387 = vmatprep.subr.mxu0 0.0
    %1388 = vmatpush1.xpose.msra.mxu0 0.0
    %1389 = vmatprep.subr.mxu0 0.0
    %1390 = vmatpush1.xpose.msra.mxu0 0.0
    %1391 = vmatprep.subr.mxu0 0.0
    %1392 = vmatpush1.xpose.msra.mxu0 0.0
    %1393 = vmatprep.subr.mxu0 0.0
    %1394 = vmatpush1.xpose.msra.mxu0 0.0
    %1395 = vmatprep.subr.mxu0 0.0
    %1396 = vmatpush1.xpose.msra.mxu0 0.0
    %1397 = vmatprep.subr.mxu0 0.0
    %1398 = vmatpush1.xpose.msra.mxu0 0.0
    %1399 = vmatprep.subr.mxu0 0.0
    %1400 = vmatpush1.xpose.msra.mxu0 0.0
    %1401 = vmatprep.subr.mxu0 0.0
    %1402 = vmatpush1.xpose.msra.mxu0 0.0
    %1403 = vmatprep.mubr.f32.mxu0 0.0
    %1404 = vmatmul.mubr.f32.gmra.mrb[0].mxu0 %v1335
    %v1405 = vpop.f32.mrb[0].mxu0
    %v1406 = vadd.f32 0.0, %v1405
    %v1407 = vpop.f32.mrb[0].mxu0
    %1408 = vdwg.mxu0
    %v1409 = vsel %vm150, %v1406, -inf
    %1410 = vmax.xlane.f32.xlu0 %v1409
    %v1411 = vpop.xlane.xlu0 %1410
    %v1412 = vsub.f32 %v1406, %v1411
    %v1413 = vmul.f32 %v1412, 1.442695
    %v1414 = vpow.pop %v1413
    %v1415 = vsel %vm150, %v1414, 0.0
    %1416 = vadd.xlane.f32.xlu0 %v1415
    %v1417 = vpop.xlane.xlu0 %1416
    %1418 = vrot.lane.b32.xlu0 %v144, 40
    %v1419 = vpop.permute.xlu0 %1418
    %v1422 = vsel %vm150, %v1414, 0
    %1424 = vmatprep.subr.mxu0 0.0
    %1425 = vmatpush1.msra.mxu0 %v1419
    %1426 = vmatprep.subr.mxu0 0.0
    %1427 = vmatpush1.msra.mxu0 0.0
    %1428 = vmatprep.subr.mxu0 0.0
    %1429 = vmatpush1.msra.mxu0 0.0
    %1430 = vmatprep.subr.mxu0 0.0
    %1431 = vmatpush1.msra.mxu0 0.0
    %1432 = vmatprep.subr.mxu0 0.0
    %1433 = vmatpush1.msra.mxu0 0.0
    %1434 = vmatprep.subr.mxu0 0.0
    %1435 = vmatpush1.msra.mxu0 0.0
    %1436 = vmatprep.subr.mxu0 0.0
    %1437 = vmatpush1.msra.mxu0 0.0
    %1438 = vmatprep.subr.mxu0 0.0
    %1439 = vmatpush1.msra.mxu0 0.0
    %1440 = vmatprep.subr.mxu0 0.0
    %1441 = vmatpush1.msra.mxu0 0.0
    %1442 = vmatprep.subr.mxu0 0.0
    %1443 = vmatpush1.msra.mxu0 0.0
    %1444 = vmatprep.subr.mxu0 0.0
    %1445 = vmatpush1.msra.mxu0 0.0
    %1446 = vmatprep.subr.mxu0 0.0
    %1447 = vmatpush1.msra.mxu0 0.0
    %1448 = vmatprep.subr.mxu0 0.0
    %1449 = vmatpush1.msra.mxu0 0.0
    %1450 = vmatprep.subr.mxu0 0.0
    %1451 = vmatpush1.msra.mxu0 0.0
    %1452 = vmatprep.subr.mxu0 0.0
    %1453 = vmatpush1.msra.mxu0 0.0
    %1454 = vmatprep.subr.mxu0 0.0
    %1455 = vmatpush1.msra.mxu0 0.0
    %1456 = vmatprep.subr.mxu0 0.0
    %1457 = vmatpush1.msra.mxu0 0.0
    %1458 = vmatprep.subr.mxu0 0.0
    %1459 = vmatpush1.msra.mxu0 0.0
    %1460 = vmatprep.subr.mxu0 0.0
    %1461 = vmatpush1.msra.mxu0 0.0
    %1462 = vmatprep.subr.mxu0 0.0
    %1463 = vmatpush1.msra.mxu0 0.0
    %1464 = vmatprep.subr.mxu0 0.0
    %1465 = vmatpush1.msra.mxu0 0.0
    %1466 = vmatprep.subr.mxu0 0.0
    %1467 = vmatpush1.msra.mxu0 0.0
    %1468 = vmatprep.subr.mxu0 0.0
    %1469 = vmatpush1.msra.mxu0 0.0
    %1470 = vmatprep.subr.mxu0 0.0
    %1471 = vmatpush1.msra.mxu0 0.0
    %1472 = vmatprep.subr.mxu0 0.0
    %1473 = vmatpush1.msra.mxu0 0.0
    %1474 = vmatprep.subr.mxu0 0.0
    %1475 = vmatpush1.msra.mxu0 0.0
    %1476 = vmatprep.subr.mxu0 0.0
    %1477 = vmatpush1.msra.mxu0 0.0
    %1478 = vmatprep.subr.mxu0 0.0
    %1479 = vmatpush1.msra.mxu0 0.0
    %1480 = vmatprep.subr.mxu0 0.0
    %1481 = vmatpush1.msra.mxu0 0.0
    %1482 = vmatprep.subr.mxu0 0.0
    %1483 = vmatpush1.msra.mxu0 0.0
    %1484 = vmatprep.subr.mxu0 0.0
    %1485 = vmatpush1.msra.mxu0 0.0
    %1486 = vmatprep.subr.mxu0 0.0
    %1487 = vmatpush1.msra.mxu0 0.0
    %1488 = vmatprep.mubr.f32.mxu0 0.0
    %1489 = vmatmul.mubr.f32.gmra.mrb[0].mxu0 %v1422
    %v1490 = vpop.f32.mrb[0].mxu0
    %v1491 = vadd.f32 0.0, %v1490
    %v1492 = vpop.f32.mrb[0].mxu0
    %1493 = vdwg.mxu0
    %v1494 = vrcp.pop %v1417
    %v1495 = vmul.f32 %v1491, %v1494
    %1497 = vrot.lane.b32.xlu0 %v1495, 24
    %v1498 = vpop.permute.xlu0 %1497
    %1500 = vst.msk [vmem:[#allocation2 + $0x8] sm:$0xff] %vm824, %v1498
    %v1501 = vld [vmem:[#allocation2] sm:$0xff]
    %v1502 = vld [vmem:[#allocation2 + $0x8] sm:$0xff]
    %v1503 = vld [vmem:[#allocation8] sm:$0xff]
    %v1504 = vld [vmem:[#allocation8 + $0x8] sm:$0xff]
    %v1505 = vld [vmem:[#allocation8 + $0x10] sm:$0xff]
    %v1506 = vld [vmem:[#allocation8 + $0x18] sm:$0xff]
    %v1507 = vld [vmem:[%s3] sm:$0x1]
    %v1509 = vlaneseq
    %v1510 = vshrl.u32 %v1509, 7
    %v1511 = vsub.s32 0, %v1510
    %v1512 = vrot.slane %v1507, %v1511
    %v1515 = vsel %vm65, %v1501, 0
    %v1518 = vsel %vm65, %v1502, 0
    %1520 = vmatprep.subr.mxu0 0.0
    %1521 = vmatpush1.msra.mxu0 %v1503
    %1522 = vmatprep.subr.mxu0 0.0
    %1523 = vmatpush1.msra.mxu0 %v1504
    %1524 = vmatprep.subr.mxu0 0.0
    %1525 = vmatpush1.msra.mxu0 %v1505
    %1526 = vmatprep.subr.mxu0 0.0
    %1527 = vmatpush1.msra.mxu0 %v1506
    %1528 = vmatprep.subr.mxu0 0.0
    %1529 = vmatpush1.msra.mxu0 0.0
    %1530 = vmatprep.subr.mxu0 0.0
    %1531 = vmatpush1.msra.mxu0 0.0
    %1532 = vmatprep.subr.mxu0 0.0
    %1533 = vmatpush1.msra.mxu0 0.0
    %1534 = vmatprep.subr.mxu0 0.0
    %1535 = vmatpush1.msra.mxu0 0.0
    %1536 = vmatprep.subr.mxu0 0.0
    %1537 = vmatpush1.msra.mxu0 0.0
    %1538 = vmatprep.subr.mxu0 0.0
    %1539 = vmatpush1.msra.mxu0 0.0
    %1540 = vmatprep.subr.mxu0 0.0
    %1541 = vmatpush1.msra.mxu0 0.0
    %1542 = vmatprep.subr.mxu0 0.0
    %1543 = vmatpush1.msra.mxu0 0.0
    %1544 = vmatprep.subr.mxu0 0.0
    %1545 = vmatpush1.msra.mxu0 0.0
    %1546 = vmatprep.subr.mxu0 0.0
    %1547 = vmatpush1.msra.mxu0 0.0
    %1548 = vmatprep.subr.mxu0 0.0
    %1549 = vmatpush1.msra.mxu0 0.0
    %1550 = vmatprep.subr.mxu0 0.0
    %1551 = vmatpush1.msra.mxu0 0.0
    %1552 = vmatprep.subr.mxu0 0.0
    %1553 = vmatpush1.msra.mxu0 0.0
    %1554 = vmatprep.subr.mxu0 0.0
    %1555 = vmatpush1.msra.mxu0 0.0
    %1556 = vmatprep.subr.mxu0 0.0
    %1557 = vmatpush1.msra.mxu0 0.0
    %1558 = vmatprep.subr.mxu0 0.0
    %1559 = vmatpush1.msra.mxu0 0.0
    %1560 = vmatprep.subr.mxu0 0.0
    %1561 = vmatpush1.msra.mxu0 0.0
    %1562 = vmatprep.subr.mxu0 0.0
    %1563 = vmatpush1.msra.mxu0 0.0
    %1564 = vmatprep.subr.mxu0 0.0
    %1565 = vmatpush1.msra.mxu0 0.0
    %1566 = vmatprep.subr.mxu0 0.0
    %1567 = vmatpush1.msra.mxu0 0.0
    %1568 = vmatprep.subr.mxu0 0.0
    %1569 = vmatpush1.msra.mxu0 0.0
    %1570 = vmatprep.subr.mxu0 0.0
    %1571 = vmatpush1.msra.mxu0 0.0
    %1572 = vmatprep.subr.mxu0 0.0
    %1573 = vmatpush1.msra.mxu0 0.0
    %1574 = vmatprep.subr.mxu0 0.0
    %1575 = vmatpush1.msra.mxu0 0.0
    %1576 = vmatprep.subr.mxu0 0.0
    %1577 = vmatpush1.msra.mxu0 0.0
    %1578 = vmatprep.subr.mxu0 0.0
    %1579 = vmatpush1.msra.mxu0 0.0
    %1580 = vmatprep.subr.mxu0 0.0
    %1581 = vmatpush1.msra.mxu0 0.0
    %1582 = vmatprep.subr.mxu0 0.0
    %1583 = vmatpush1.msra.mxu0 0.0
    %1584 = vmatprep.mubr.f32.mxu0 0.0
    %1585 = vmatmul.mubr.f32.gmra.mrb[0].mxu0 %v1515
    %v1586 = vpop.f32.mrb[0].mxu0
    %v1587 = vadd.f32 %v1512, %v1586
    %v1588 = vpop.f32.mrb[0].mxu0
    %1589 = vmatprep.mubr.f32.mxu0 0.0
    %1590 = vmatmul.mubr.f32.gmra.mrb[0].mxu0 %v1518
    %v1591 = vpop.f32.mrb[0].mxu0
    %v1592 = vadd.f32 %v1512, %v1591
    %v1593 = vpop.f32.mrb[0].mxu0
    %1594 = vdwg.mxu0
    %1595 = vst [vmem:[#allocation9] sm:$0xff] %v1587
    %1596 = vst [vmem:[#allocation9 + $0x8] sm:$0xff] %v1592
    // Predicated region
    $region30: #{tpu_custom_call.1} parent=1 // pred_check
      _
    $region31: #{tpu_custom_call.1} parent=1 // pred_check_branch
      %1598 = sbr.rel (0) target = $region33
    $region32: #{tpu_custom_call.1} parent=1 // pred_region
      %s1600 = ssub.s32 256, 256
      %1601 = vsyncadd [#allocation5], %s1600
      %s1602 = sshll.u32 [#allocation9], 4
      %s1603 = int_to_ptr.vmem [resolvable:$true] %s1602
      %1608 = dma.vmem_to_hbm [thread:$0]  %s1603, 256, %s4, [#allocation5], 128, 128, 8
    $region33: #{tpu_custom_call.1} parent=1 // pred_fallthru
      _
    // Predicated region
    $region34: #{tpu_custom_call.1} parent=1 // pred_check
      _
    $region35: #{tpu_custom_call.1} parent=1 // pred_check_branch
      %1610 = sbr.rel (0) target = $region37
    $region36: #{tpu_custom_call.1} parent=1 // pred_region
      %1611 = dma.done [#allocation5], 256
    $region37: #{tpu_custom_call.1} parent=1 // pred_fallthru
      _
    %1612 = vsyncpa [#allocation4], 1
    %1613 = vsyncpa [#allocation7], 1
    %1614 = vsyncpa [#allocation5], 1

</llo_original>
